<compile_context>
chip_gen: v7x
topology: tpu7x:2x2x1
jax: 0.10.0
libtpu: 0.0.40
codegen_flags: <defaults>
</compile_context>

<pallas_src>
import math

import jax
import jax.numpy as jnp
from jax.experimental import pallas as pl
from jax.experimental.pallas import tpu as pltpu


def loaem_kernel(temp_ref, refer_ref,
                 wq_ref, wkv_ref, wo_ref,
                 w1_ref, b1_ref, w2_ref, b2_ref,
                 wout_ref, bout_ref,
                 occu_ref,
                 k_scr, v_scr):
    # temp_ref:  [1, TQ, D]   (query tile of `temp`)
    # refer_ref: [1, S,  D]   (full `refer` sequence, DMA'd once per batch)
    # occu_ref:  [1, 1,  TQ]  (lane-dense occupancy row for this tile)
    H = wq_ref.shape[1]

    # --- K/V projection: once per batch, kept resident in VMEM scratch ------
    @pl.when(pl.program_id(1) == 0)
    def _():
        refer = refer_ref[0].astype(jnp.bfloat16)                       # [S, D]
        kv = jnp.dot(refer, wkv_ref[...],
                     preferred_element_type=jnp.float32)                # [S, 2H]
        k_scr[...] = kv[:, :H].astype(jnp.bfloat16)
        v_scr[...] = kv[:, H:].astype(jnp.bfloat16)

    # --- query projection (bf16 MXU, f32 accumulate) ------------------------
    temp = temp_ref[0].astype(jnp.bfloat16)                             # [TQ, D]
    q = jnp.dot(temp, wq_ref[...],
                preferred_element_type=jnp.float32)                     # [TQ, H] f32

    # fold 1/sqrt(H) into q (TQ*H elems) instead of scaling the [TQ,S] scores
    scale = 1.0 / math.sqrt(H)
    qs = (q * scale).astype(jnp.bfloat16)

    # --- temporal cross-attention: temp attends to refer --------------------
    s = jnp.dot(qs, k_scr[...].T,
                preferred_element_type=jnp.float32)                     # [TQ, S]
    m = jnp.max(s, axis=-1, keepdims=True)
    p = jnp.exp(s - m)                                                  # f32 (EUP)
    l = jnp.sum(p, axis=-1, keepdims=True)
    inv_l = pl.reciprocal(l, approx=True)                               # [TQ, 1]
    attn = jnp.dot(p.astype(jnp.bfloat16), v_scr[...],
                   preferred_element_type=jnp.float32) * inv_l          # [TQ, H]

    # --- residual + attention output projection -----------------------------
    h = q + jnp.dot(attn.astype(jnp.bfloat16), wo_ref[...],
                    preferred_element_type=jnp.float32)                 # [TQ, H]

    # --- feed-forward block with residual ------------------------------------
    f = jnp.dot(h.astype(jnp.bfloat16), w1_ref[...],
                preferred_element_type=jnp.float32) + b1_ref[...]
    f = jnp.maximum(f, 0.0)                                             # ReLU (f32)
    g = jnp.dot(f.astype(jnp.bfloat16), w2_ref[...],
                preferred_element_type=jnp.float32) + b2_ref[...] + h   # [TQ, H]

    # --- occupancy head: [1,H] @ [H,TQ] -> lane-dense [1,TQ] row -------------
    o = jnp.dot(wout_ref[...], g.astype(jnp.bfloat16).T,
                preferred_element_type=jnp.float32)                     # [1, TQ]
    occu_ref[0] = jax.nn.sigmoid(o + bout_ref[...])                     # [1, TQ]


def loaem_forward(temp, refer, params, *, tq=128):
    B, S, D = temp.shape
    H = params["wq"].shape[1]
    assert S % tq == 0, "sequence length must be a multiple of the query tile"
    nq = S // tq

    # Pack weights wrapper-side: bf16 for MXU operands, fused K/V weight,
    # row-vector head weight.  Biases stay f32.
    wq_bf = (params["wq"]).astype(jnp.bfloat16)                         # [D, H]
    wkv_bf = jnp.concatenate([params["wk"], params["wv"]],
                             axis=1).astype(jnp.bfloat16)               # [D, 2H]
    wo_bf = params["wo"].astype(jnp.bfloat16)                           # [H, H]
    w1_bf = params["w1"].astype(jnp.bfloat16)                           # [H, H]
    w2_bf = params["w2"].astype(jnp.bfloat16)                           # [H, H]
    wout_row = params["wout"].T.astype(jnp.bfloat16)                    # [1, H]
    b1 = params["b1"]                                                   # [1, H]
    b2 = params["b2"]                                                   # [1, H]
    bout = params["bout"]                                               # [1, 1]

    def w_spec(shape):
        return pl.BlockSpec(shape, lambda b, qi: (0,) * len(shape))

    grid_spec = pltpu.PrefetchScalarGridSpec(
        num_scalar_prefetch=0,
        grid=(B, nq),
        in_specs=[
            pl.BlockSpec((1, tq, D), lambda b, qi: (b, qi, 0)),   # temp (query tile)
            pl.BlockSpec((1, S, D), lambda b, qi: (b, 0, 0)),     # refer (full, per batch)
            w_spec((D, H)),       # wq
            w_spec((D, 2 * H)),   # wkv (fused K/V)
            w_spec((H, H)),       # wo
            w_spec((H, H)),       # w1
            w_spec((1, H)),       # b1
            w_spec((H, H)),       # w2
            w_spec((1, H)),       # b2
            w_spec((1, H)),       # wout (row)
            w_spec((1, 1)),       # bout
        ],
        # Lane-dense output: (B, 1, S) with (1, 1, TQ) blocks -> unmasked
        # 128-lane stores; reshaped to (B, S, 1) in the wrapper.
        out_specs=pl.BlockSpec((1, 1, tq), lambda b, qi: (b, 0, qi)),
        scratch_shapes=[
            pltpu.VMEM((S, H), jnp.bfloat16),   # K (per batch)
            pltpu.VMEM((S, H), jnp.bfloat16),   # V (per batch)
        ],
    )

    occu = pl.pallas_call(
        loaem_kernel,
        out_shape=jax.ShapeDtypeStruct((B, 1, S), jnp.float32),
        grid_spec=grid_spec,
        compiler_params=pltpu.CompilerParams(
            # batch parallel (megacore); query axis arbitrary so the K/V
            # scratch computed at qi==0 is valid for the remaining tiles.
            dimension_semantics=("parallel", "arbitrary"),
            vmem_limit_bytes=32 * 1024 * 1024,
        ),
    )(temp, refer,
      wq_bf, wkv_bf, wo_bf,
      w1_bf, b1, w2_bf, b2,
      wout_row, bout)

    return occu[:, 0, :, None]                                          # [B, S, 1]


def loaem_reference(temp, refer, params):
    """Pure-JAX f32 reference of the same block (for a sanity check)."""
    H = params["wq"].shape[1]
    q = temp @ params["wq"]
    k = refer @ params["wk"]
    v = refer @ params["wv"]
    s = jnp.einsum("bsh,bth->bst", q, k) / math.sqrt(H)
    p = jax.nn.softmax(s, axis=-1)
    attn = jnp.einsum("bst,bth->bsh", p, v)
    h = q + attn @ params["wo"]
    f = jnp.maximum(h @ params["w1"] + params["b1"], 0.0)
    g = f @ params["w2"] + params["b2"] + h
    o = g @ params["wout"] + params["bout"]
    return jax.nn.sigmoid(o)


def init_params(key, d_in, hidden):
    ks = jax.random.split(key, 8)
    std = 0.02
    return {
        "wq":   jax.random.normal(ks[0], (d_in, hidden), jnp.float32) * std,
        "wk":   jax.random.normal(ks[1], (d_in, hidden), jnp.float32) * std,
        "wv":   jax.random.normal(ks[2], (d_in, hidden), jnp.float32) * std,
        "wo":   jax.random.normal(ks[3], (hidden, hidden), jnp.float32) * std,
        "w1":   jax.random.normal(ks[4], (hidden, hidden), jnp.float32) * std,
        "b1":   jnp.zeros((1, hidden), jnp.float32),
        "w2":   jax.random.normal(ks[5], (hidden, hidden), jnp.float32) * std,
        "b2":   jnp.zeros((1, hidden), jnp.float32),
        "wout": jax.random.normal(ks[6], (hidden, 1), jnp.float32) * std,
        "bout": jnp.zeros((1, 1), jnp.float32),
    }


if __name__ == "__main__":
    key = jax.random.PRNGKey(0)
    k_temp, k_refer, k_params = jax.random.split(key, 3)

    # Small shapes consistent with the sequence model (sequence_size scaled
    # down from 1024 -> 256, hidden -> 128 for lane alignment).  TQ=128 gives
    # a real (B, S//TQ) = (2, 2) grid so the query tiling is exercised.
    B, S, D, H, TQ = 2, 256, 128, 128, 128

    temp = jax.random.normal(k_temp, (B, S, D), jnp.float32)
    refer = jax.random.normal(k_refer, (B, S, D), jnp.float32)
    params = init_params(k_params, D, H)

    occu = loaem_forward(temp, refer, params, tq=TQ)
    occu = jax.block_until_ready(occu)

    assert occu.shape == (B, S, 1)
    assert bool(jnp.all(jnp.isfinite(occu)))

    # Loose check vs an f32 pure-JAX reference (kernel uses bf16 MXU inputs
    # and an approximate reciprocal in the softmax).
    ref = loaem_reference(temp, refer, params)
    max_err = float(jnp.max(jnp.abs(occu - ref)))
    assert max_err < 5e-2, f"max abs error {max_err}"

    print("KERNEL_OK")
</pallas_src>

<mosaic_0001>
module attributes {stable_mosaic.version = 11 : i64} {
  func.func @loaem_kernel(%arg0: i32, %arg1: i32, %arg2: memref<1x128x128xf32, #tpu.memory_space<vmem>>, %arg3: memref<1x256x128xf32, #tpu.memory_space<vmem>>, %arg4: memref<128x128xbf16, #tpu.memory_space<vmem>>, %arg5: memref<128x256xbf16, #tpu.memory_space<vmem>>, %arg6: memref<128x128xbf16, #tpu.memory_space<vmem>>, %arg7: memref<128x128xbf16, #tpu.memory_space<vmem>>, %arg8: memref<1x128xf32, #tpu.memory_space<vmem>>, %arg9: memref<128x128xbf16, #tpu.memory_space<vmem>>, %arg10: memref<1x128xf32, #tpu.memory_space<vmem>>, %arg11: memref<1x128xbf16, #tpu.memory_space<vmem>>, %arg12: memref<1x1xf32, #tpu.memory_space<vmem>>, %arg13: memref<1x1x128xf32, #tpu.memory_space<vmem>>, %arg14: memref<256x128xbf16, #tpu.memory_space<vmem>>, %arg15: memref<256x128xbf16, #tpu.memory_space<vmem>>) attributes {dimension_semantics = [#tpu.dimension_semantics<parallel>, #tpu.dimension_semantics<arbitrary>], iteration_bounds = array<i64: 2, 2>, scalar_prefetch = 0 : i64, scratch_operands = 2 : i64, tpu.core_type = #tpu.core_type<tc>, window_params = [{transform_indices = @transform_0, window_bounds = array<i64: 1, 128, 128>}, {transform_indices = @transform_1, window_bounds = array<i64: 1, 256, 128>}, {pipeline_mode = #tpu.pipeline_mode<synchronous>, transform_indices = @transform_2, window_bounds = array<i64: 128, 128>}, {pipeline_mode = #tpu.pipeline_mode<synchronous>, transform_indices = @transform_3, window_bounds = array<i64: 128, 256>}, {pipeline_mode = #tpu.pipeline_mode<synchronous>, transform_indices = @transform_4, window_bounds = array<i64: 128, 128>}, {pipeline_mode = #tpu.pipeline_mode<synchronous>, transform_indices = @transform_5, window_bounds = array<i64: 128, 128>}, {pipeline_mode = #tpu.pipeline_mode<synchronous>, transform_indices = @transform_6, window_bounds = array<i64: 1, 128>}, {pipeline_mode = #tpu.pipeline_mode<synchronous>, transform_indices = @transform_7, window_bounds = array<i64: 128, 128>}, {pipeline_mode = #tpu.pipeline_mode<synchronous>, transform_indices = @transform_8, window_bounds = array<i64: 1, 128>}, {pipeline_mode = #tpu.pipeline_mode<synchronous>, transform_indices = @transform_9, window_bounds = array<i64: 1, 128>}, {pipeline_mode = #tpu.pipeline_mode<synchronous>, transform_indices = @transform_10, window_bounds = array<i64: 1, 1>}, {transform_indices = @transform_11, window_bounds = array<i64: 1, 1, 128>}]} {
    %c0_i32 = arith.constant 0 : i32
    %0 = arith.cmpi eq, %arg1, %c0_i32 : i32
    %1 = arith.extui %0 : i1 to i32
    %c0_i32_0 = arith.constant 0 : i32
    %2 = arith.cmpi ne, %1, %c0_i32_0 : i32
    scf.if %2 {
      %c0_37 = arith.constant 0 : index
      %c0_38 = arith.constant 0 : index
      %c0_39 = arith.constant 0 : index
      %61 = vector.load %arg3[%c0_37, %c0_38, %c0_39] : memref<1x256x128xf32, #tpu.memory_space<vmem>>, vector<1x256x128xf32>
      %62 = vector.shape_cast %61 : vector<1x256x128xf32> to vector<256x128xf32>
      %63 = arith.truncf %62 : vector<256x128xf32> to vector<256x128xbf16>
      %c0_40 = arith.constant 0 : index
      %c0_41 = arith.constant 0 : index
      %64 = vector.load %arg5[%c0_40, %c0_41] : memref<128x256xbf16, #tpu.memory_space<vmem>>, vector<128x256xbf16>
      %cst_42 = arith.constant dense<0.000000e+00> : vector<256x256xf32>
      %65 = tpu.matmul %63, %64, %cst_42 {dimension_numbers = #tpu.dot_dimension_numbers<[1], [0], [0], [1], [0, 0, 1, 1], [], []>} : vector<256x128xbf16>, vector<128x256xbf16>, vector<256x256xf32> -> vector<256x256xf32>
      %66 = vector.extract_strided_slice %65 {offsets = [0, 0], sizes = [256, 128], strides = [1, 1]} : vector<256x256xf32> to vector<256x128xf32>
      %67 = arith.truncf %66 : vector<256x128xf32> to vector<256x128xbf16>
      %c0_43 = arith.constant 0 : index
      %c0_44 = arith.constant 0 : index
      %68 = vector.load %arg14[%c0_43, %c0_44] : memref<256x128xbf16, #tpu.memory_space<vmem>>, vector<256x128xbf16>
      tpu.vector_store %arg14[%c0_43, %c0_44], %67 {strides = array<i32>} : memref<256x128xbf16, #tpu.memory_space<vmem>>, vector<256x128xbf16>,
      %69 = vector.extract_strided_slice %65 {offsets = [0, 128], sizes = [256, 128], strides = [1, 1]} : vector<256x256xf32> to vector<256x128xf32>
      %70 = arith.truncf %69 : vector<256x128xf32> to vector<256x128xbf16>
      %c0_45 = arith.constant 0 : index
      %c0_46 = arith.constant 0 : index
      %71 = vector.load %arg15[%c0_45, %c0_46] : memref<256x128xbf16, #tpu.memory_space<vmem>>, vector<256x128xbf16>
      tpu.vector_store %arg15[%c0_45, %c0_46], %70 {strides = array<i32>} : memref<256x128xbf16, #tpu.memory_space<vmem>>, vector<256x128xbf16>,
    } else {
    }
    %c0 = arith.constant 0 : index
    %c0_1 = arith.constant 0 : index
    %c0_2 = arith.constant 0 : index
    %3 = vector.load %arg2[%c0, %c0_1, %c0_2] : memref<1x128x128xf32, #tpu.memory_space<vmem>>, vector<1x128x128xf32>
    %4 = vector.shape_cast %3 : vector<1x128x128xf32> to vector<128x128xf32>
    %5 = arith.truncf %4 : vector<128x128xf32> to vector<128x128xbf16>
    %c0_3 = arith.constant 0 : index
    %c0_4 = arith.constant 0 : index
    %6 = vector.load %arg4[%c0_3, %c0_4] : memref<128x128xbf16, #tpu.memory_space<vmem>>, vector<128x128xbf16>
    %cst = arith.constant dense<0.000000e+00> : vector<128x128xf32>
    %7 = tpu.matmul %5, %6, %cst {dimension_numbers = #tpu.dot_dimension_numbers<[1], [0], [0], [1], [0, 0, 1, 1], [], []>} : vector<128x128xbf16>, vector<128x128xbf16>, vector<128x128xf32> -> vector<128x128xf32>
    %cst_5 = arith.constant 0.0883883461 : f32
    %8 = vector.broadcast %cst_5 : f32 to vector<128x128xf32>
    %9 = arith.mulf %7, %8 : vector<128x128xf32>
    %10 = arith.truncf %9 : vector<128x128xf32> to vector<128x128xbf16>
    %c0_6 = arith.constant 0 : index
    %c0_7 = arith.constant 0 : index
    %11 = vector.load %arg14[%c0_6, %c0_7] : memref<256x128xbf16, #tpu.memory_space<vmem>>, vector<256x128xbf16>
    %12 = tpu.transpose %11, [1, 0] : vector<256x128xbf16> -> vector<128x256xbf16>
    %cst_8 = arith.constant dense<0.000000e+00> : vector<128x256xf32>
    %13 = tpu.matmul %10, %12, %cst_8 {dimension_numbers = #tpu.dot_dimension_numbers<[1], [0], [0], [1], [0, 0, 1, 1], [], []>} : vector<128x128xbf16>, vector<128x256xbf16>, vector<128x256xf32> -> vector<128x256xf32>
    %cst_9 = arith.constant dense<0xFF800000> : vector<128xf32>
    %14 = vector.multi_reduction <maximumf>, %13, %cst_9 [1] : vector<128x256xf32> to vector<128xf32>
    %15 = vector.shape_cast %14 : vector<128xf32> to vector<128x1xf32>
    %16 = vector.broadcast %15 : vector<128x1xf32> to vector<128x256xf32>
    %17 = arith.subf %13, %16 : vector<128x256xf32>
    %18 = math.exp %17 : vector<128x256xf32>
    %cst_10 = arith.constant dense<0.000000e+00> : vector<128xf32>
    %19 = vector.multi_reduction <add>, %18, %cst_10 [1] : vector<128x256xf32> to vector<128xf32>
    %20 = vector.shape_cast %19 : vector<128xf32> to vector<128x1xf32>
    %21 = tpu.reciprocal %20 {approx = true} : vector<128x1xf32> -> vector<128x1xf32>
    %22 = arith.truncf %18 : vector<128x256xf32> to vector<128x256xbf16>
    %c0_11 = arith.constant 0 : index
    %c0_12 = arith.constant 0 : index
    %23 = vector.load %arg15[%c0_11, %c0_12] : memref<256x128xbf16, #tpu.memory_space<vmem>>, vector<256x128xbf16>
    %cst_13 = arith.constant dense<0.000000e+00> : vector<128x128xf32>
    %24 = tpu.matmul %22, %23, %cst_13 {dimension_numbers = #tpu.dot_dimension_numbers<[1], [0], [0], [1], [0, 0, 1, 1], [], []>} : vector<128x256xbf16>, vector<256x128xbf16>, vector<128x128xf32> -> vector<128x128xf32>
    %25 = vector.broadcast %21 : vector<128x1xf32> to vector<128x128xf32>
    %26 = arith.mulf %24, %25 : vector<128x128xf32>
    %27 = arith.truncf %26 : vector<128x128xf32> to vector<128x128xbf16>
    %c0_14 = arith.constant 0 : index
    %c0_15 = arith.constant 0 : index
    %28 = vector.load %arg6[%c0_14, %c0_15] : memref<128x128xbf16, #tpu.memory_space<vmem>>, vector<128x128xbf16>
    %cst_16 = arith.constant dense<0.000000e+00> : vector<128x128xf32>
    %29 = tpu.matmul %27, %28, %cst_16 {dimension_numbers = #tpu.dot_dimension_numbers<[1], [0], [0], [1], [0, 0, 1, 1], [], []>} : vector<128x128xbf16>, vector<128x128xbf16>, vector<128x128xf32> -> vector<128x128xf32>
    %30 = arith.addf %7, %29 : vector<128x128xf32>
    %31 = arith.truncf %30 : vector<128x128xf32> to vector<128x128xbf16>
    %c0_17 = arith.constant 0 : index
    %c0_18 = arith.constant 0 : index
    %32 = vector.load %arg7[%c0_17, %c0_18] : memref<128x128xbf16, #tpu.memory_space<vmem>>, vector<128x128xbf16>
    %cst_19 = arith.constant dense<0.000000e+00> : vector<128x128xf32>
    %33 = tpu.matmul %31, %32, %cst_19 {dimension_numbers = #tpu.dot_dimension_numbers<[1], [0], [0], [1], [0, 0, 1, 1], [], []>} : vector<128x128xbf16>, vector<128x128xbf16>, vector<128x128xf32> -> vector<128x128xf32>
    %c0_20 = arith.constant 0 : index
    %c0_21 = arith.constant 0 : index
    %34 = vector.load %arg8[%c0_20, %c0_21] : memref<1x128xf32, #tpu.memory_space<vmem>>, vector<1x128xf32>
    %35 = vector.broadcast %34 : vector<1x128xf32> to vector<128x128xf32>
    %36 = arith.addf %33, %35 : vector<128x128xf32>
    %cst_22 = arith.constant 0.000000e+00 : f32
    %37 = vector.broadcast %cst_22 : f32 to vector<128x128xf32>
    %38 = arith.maximumf %36, %37 : vector<128x128xf32>
    %39 = arith.truncf %38 : vector<128x128xf32> to vector<128x128xbf16>
    %c0_23 = arith.constant 0 : index
    %c0_24 = arith.constant 0 : index
    %40 = vector.load %arg9[%c0_23, %c0_24] : memref<128x128xbf16, #tpu.memory_space<vmem>>, vector<128x128xbf16>
    %cst_25 = arith.constant dense<0.000000e+00> : vector<128x128xf32>
    %41 = tpu.matmul %39, %40, %cst_25 {dimension_numbers = #tpu.dot_dimension_numbers<[1], [0], [0], [1], [0, 0, 1, 1], [], []>} : vector<128x128xbf16>, vector<128x128xbf16>, vector<128x128xf32> -> vector<128x128xf32>
    %c0_26 = arith.constant 0 : index
    %c0_27 = arith.constant 0 : index
    %42 = vector.load %arg10[%c0_26, %c0_27] : memref<1x128xf32, #tpu.memory_space<vmem>>, vector<1x128xf32>
    %43 = vector.broadcast %42 : vector<1x128xf32> to vector<128x128xf32>
    %44 = arith.addf %41, %43 : vector<128x128xf32>
    %45 = arith.addf %44, %30 : vector<128x128xf32>
    %c0_28 = arith.constant 0 : index
    %c0_29 = arith.constant 0 : index
    %46 = vector.load %arg11[%c0_28, %c0_29] : memref<1x128xbf16, #tpu.memory_space<vmem>>, vector<1x128xbf16>
    %47 = arith.truncf %45 : vector<128x128xf32> to vector<128x128xbf16>
    %48 = tpu.transpose %47, [1, 0] : vector<128x128xbf16> -> vector<128x128xbf16>
    %cst_30 = arith.constant dense<0.000000e+00> : vector<1x128xf32>
    %49 = tpu.matmul %46, %48, %cst_30 {dimension_numbers = #tpu.dot_dimension_numbers<[1], [0], [0], [1], [0, 0, 1, 1], [], []>} : vector<1x128xbf16>, vector<128x128xbf16>, vector<1x128xf32> -> vector<1x128xf32>
    %c0_31 = arith.constant 0 : index
    %c0_32 = arith.constant 0 : index
    %50 = vector.load %arg12[%c0_31, %c0_32] : memref<1x1xf32, #tpu.memory_space<vmem>>, vector<1x1xf32>
    %51 = vector.broadcast %50 : vector<1x1xf32> to vector<1x128xf32>
    %52 = arith.addf %49, %51 : vector<1x128xf32>
    %53 = arith.negf %52 : vector<1x128xf32>
    %54 = math.exp %53 : vector<1x128xf32>
    %cst_33 = arith.constant 1.000000e+00 : f32
    %55 = vector.broadcast %cst_33 : f32 to vector<1x128xf32>
    %56 = arith.addf %55, %54 : vector<1x128xf32>
    %57 = arith.divf %55, %56 : vector<1x128xf32>
    %c0_34 = arith.constant 0 : index
    %c0_35 = arith.constant 0 : index
    %c0_36 = arith.constant 0 : index
    %58 = vector.load %arg13[%c0_34, %c0_35, %c0_36] : memref<1x1x128xf32, #tpu.memory_space<vmem>>, vector<1x1x128xf32>
    %59 = vector.shape_cast %58 : vector<1x1x128xf32> to vector<1x128xf32>
    %60 = vector.shape_cast %57 : vector<1x128xf32> to vector<1x1x128xf32>
    tpu.vector_store %arg13[%c0_34, %c0_35, %c0_36], %60 {strides = array<i32>} : memref<1x1x128xf32, #tpu.memory_space<vmem>>, vector<1x1x128xf32>,
    return
  }
  func.func @transform_0(%arg0: i32, %arg1: i32) -> (i32, i32, i32) {
    %c0_i32 = arith.constant 0 : i32
    %c0_i32_0 = arith.constant 0 : i32
    return %arg0, %arg1, %c0_i32 : i32, i32, i32
  }
  func.func @transform_1(%arg0: i32, %arg1: i32) -> (i32, i32, i32) {
    %c0_i32 = arith.constant 0 : i32
    %c0_i32_0 = arith.constant 0 : i32
    %c0_i32_1 = arith.constant 0 : i32
    return %arg0, %c0_i32, %c0_i32_0 : i32, i32, i32
  }
  func.func @transform_2(%arg0: i32, %arg1: i32) -> (i32, i32) {
    %c0_i32 = arith.constant 0 : i32
    %c0_i32_0 = arith.constant 0 : i32
    %c0_i32_1 = arith.constant 0 : i32
    return %c0_i32, %c0_i32_0 : i32, i32
  }
  func.func @transform_3(%arg0: i32, %arg1: i32) -> (i32, i32) {
    %c0_i32 = arith.constant 0 : i32
    %c0_i32_0 = arith.constant 0 : i32
    %c0_i32_1 = arith.constant 0 : i32
    return %c0_i32, %c0_i32_0 : i32, i32
  }
  func.func @transform_4(%arg0: i32, %arg1: i32) -> (i32, i32) {
    %c0_i32 = arith.constant 0 : i32
    %c0_i32_0 = arith.constant 0 : i32
    %c0_i32_1 = arith.constant 0 : i32
    return %c0_i32, %c0_i32_0 : i32, i32
  }
  func.func @transform_5(%arg0: i32, %arg1: i32) -> (i32, i32) {
    %c0_i32 = arith.constant 0 : i32
    %c0_i32_0 = arith.constant 0 : i32
    %c0_i32_1 = arith.constant 0 : i32
    return %c0_i32, %c0_i32_0 : i32, i32
  }
  func.func @transform_6(%arg0: i32, %arg1: i32) -> (i32, i32) {
    %c0_i32 = arith.constant 0 : i32
    %c0_i32_0 = arith.constant 0 : i32
    %c0_i32_1 = arith.constant 0 : i32
    return %c0_i32, %c0_i32_0 : i32, i32
  }
  func.func @transform_7(%arg0: i32, %arg1: i32) -> (i32, i32) {
    %c0_i32 = arith.constant 0 : i32
    %c0_i32_0 = arith.constant 0 : i32
    %c0_i32_1 = arith.constant 0 : i32
    return %c0_i32, %c0_i32_0 : i32, i32
  }
  func.func @transform_8(%arg0: i32, %arg1: i32) -> (i32, i32) {
    %c0_i32 = arith.constant 0 : i32
    %c0_i32_0 = arith.constant 0 : i32
    %c0_i32_1 = arith.constant 0 : i32
    return %c0_i32, %c0_i32_0 : i32, i32
  }
  func.func @transform_9(%arg0: i32, %arg1: i32) -> (i32, i32) {
    %c0_i32 = arith.constant 0 : i32
    %c0_i32_0 = arith.constant 0 : i32
    %c0_i32_1 = arith.constant 0 : i32
    return %c0_i32, %c0_i32_0 : i32, i32
  }
  func.func @transform_10(%arg0: i32, %arg1: i32) -> (i32, i32) {
    %c0_i32 = arith.constant 0 : i32
    %c0_i32_0 = arith.constant 0 : i32
    %c0_i32_1 = arith.constant 0 : i32
    return %c0_i32, %c0_i32_0 : i32, i32
  }
  func.func @transform_11(%arg0: i32, %arg1: i32) -> (i32, i32, i32) {
    %c0_i32 = arith.constant 0 : i32
    %c0_i32_0 = arith.constant 0 : i32
    return %arg0, %c0_i32, %arg1 : i32, i32, i32
  }
}

</mosaic_0001>

<llo_original>
// kernel: tpu_custom_call.1
$region0: #{tpu_custom_call.1}
  #allocation0 [shape = 'u32[]', space=smem, size = 0x4, offset = 0x4, fixed_abs, tag = 'smem constant byte address 0x4 - core index']
  #allocation1 [shape = 'u32[144,128]{1,0:T(1,128)}', space=vmem, size = 0x12000, scoped, tag = 'internal scratch']
  #allocation2 [shape = 'bf16[256,128]{1,0:T(16,128)(2,1)}', space=vmem, size = 0x10000, scoped, tag = 'scratch operand']
  #allocation3 [shape = 'bf16[256,128]{1,0:T(16,128)(2,1)}', space=vmem, size = 0x10000, scoped, tag = 'scratch operand']
  #allocation4 [shape = 'f32[1,1]{1,0:T(1,128)S(1)}', space=vmem, size = 0x200, scoped, tag = 'scoped memory for tpu_custom_call.1']
  %s0 = inlined_call_operand.hbm [shape: f32[2,256,128], index: 0, kind: input, shape index: {}]
  %s1 = inlined_call_operand.hbm [shape: f32[2,256,128], index: 1, kind: input, shape index: {}]
  %s2 = inlined_call_operand.hbm [shape: bf16[128,128], index: 2, kind: input, shape index: {}]
  %s3 = inlined_call_operand.hbm [shape: bf16[128,256], index: 3, kind: input, shape index: {}]
  %s4 = inlined_call_operand.hbm [shape: bf16[128,128], index: 4, kind: input, shape index: {}]
  %s5 = inlined_call_operand.hbm [shape: bf16[128,128], index: 5, kind: input, shape index: {}]
  %s6 = inlined_call_operand.vmem [shape: f32[1,128], index: 6, kind: input, shape index: {}]
  %s7 = inlined_call_operand.hbm [shape: bf16[128,128], index: 7, kind: input, shape index: {}]
  %s8 = inlined_call_operand.vmem [shape: f32[1,128], index: 8, kind: input, shape index: {}]
  %s9 = inlined_call_operand.vmem [shape: bf16[1,128], index: 9, kind: input, shape index: {}]
  %s10 = inlined_call_operand.<no memory space> [shape: f32[1,1], index: 10, kind: input, shape index: {}]
  %s11 = inlined_call_operand.hbm [shape: f32[2,1,256], index: 11, kind: output, shape index: {}]
  %s12 = sld [smem:[#allocation0]]
  $region109: #{tpu_custom_call.1} parent=0
    _
  %s14 = ssub.s32 1, %s12
  %s15 = scalar_select 0, %s14, %s12
  %v16 = vstv %s10
  %17 = vst [vmem:[#allocation4] sm:$0x1] %v16
  $region1: #{tpu_custom_call.1} parent=0
    #allocation5 [shape = 'u8[131072]{0}', space=vmem, size = 0x20000, scoped, tag = 'input window, operand 0']
    #allocation6 [shape = 's32[2]{0}', space=sflag, size = 0x8, scoped, tag = 'scoped memory for tpu_custom_call.1']
    #allocation7 [shape = 's32[2]{0}', space=sflag, size = 0x8, scoped, tag = 'scoped memory for tpu_custom_call.1']
    #allocation8 [shape = 'u8[262144]{0}', space=vmem, size = 0x40000, scoped, tag = 'input window, operand 1']
    #allocation9 [shape = 's32[2]{0}', space=sflag, size = 0x8, scoped, tag = 'scoped memory for tpu_custom_call.1']
    #allocation10 [shape = 'u8[32768]{0}', space=vmem, size = 0x8000, scoped, tag = 'input window, operand 2, single buffered']
    #allocation11 [shape = 'u8[65536]{0}', space=vmem, size = 0x10000, scoped, tag = 'input window, operand 3, single buffered']
    #allocation12 [shape = 's32[1]{0}', space=sflag, size = 0x4, scoped, tag = 'scoped memory for tpu_custom_call.1']
    #allocation13 [shape = 'u8[32768]{0}', space=vmem, size = 0x8000, scoped, tag = 'input window, operand 4, single buffered']
    #allocation14 [shape = 'u8[32768]{0}', space=vmem, size = 0x8000, scoped, tag = 'input window, operand 5, single buffered']
    #allocation15 [shape = 's32[1]{0}', space=sflag, size = 0x4, scoped, tag = 'scoped memory for tpu_custom_call.1']
    #allocation16 [shape = 'u8[32768]{0}', space=vmem, size = 0x8000, scoped, tag = 'input window, operand 7, single buffered']
    #allocation17 [shape = 'u8[1024]{0}', space=vmem, size = 0x400, scoped, tag = 'output window, operand 0']
    %18 = vsyncpa [#allocation6], 0
    %s19 = scalar_lea.sflag [#allocation6], 1
    %20 = vsyncpa %s19, 0
    %21 = vsyncpa [#allocation9], 0
    %s22 = scalar_lea.sflag [#allocation9], 1
    %23 = vsyncpa %s22, 0
    %24 = vsyncpa [#allocation12], 0
    %25 = vsyncpa [#allocation15], 0
    %26 = vsyncpa [#allocation7], 0
    %s27 = scalar_lea.sflag [#allocation7], 1
    %28 = vsyncpa %s27, 0
    loop: start=0, step=1, limit=6
    $region2: #{tpu_custom_call.1} parent=1 // loop_pre_header
      _
    $region3: #{tpu_custom_call.1} parent=1 // loop_header
      %s30 = sphi 0, %s34
      %p31 = scmp.ge.s32.totalorder %s30, 6
      %s37 = sphi 0, %s49
      %s38 = sphi 0, %s45
      %s39 = sphi 0, %s37
      %s40 = sphi 0, %s38
      %s41 = sphi 0, %s39
      %s42 = sphi 0, %s40
      %s54 = sphi 0, %s56
      %s57 = sphi 0, %s54
      %s58 = sphi 0, %s57
      %s74 = sphi 0, %s58
      %s80 = sphi 0, %s82
      %s83 = sphi 0, %s80
      %s84 = sphi 0, %s83
      %s100 = sphi 0, %s84
      %s104 = sphi 0, %s104
      %s106 = sphi 0, %s104
      %s107 = sphi 0, %s106
      %s121 = sphi 0, %s107
      %s125 = sphi 0, %s125
      %s127 = sphi 0, %s125
      %s128 = sphi 0, %s127
      %s142 = sphi 0, %s128
      %s146 = sphi 0, %s146
      %s148 = sphi 0, %s146
      %s149 = sphi 0, %s148
      %s163 = sphi 0, %s149
      %s167 = sphi 0, %s167
      %s169 = sphi 0, %s167
      %s170 = sphi 0, %s169
      %s184 = sphi 0, %s170
      %s188 = sphi 0, %s188
      %s190 = sphi 0, %s188
      %s191 = sphi 0, %s190
      %s205 = sphi 0, %s191
      %s209 = sphi 0, %s209
      %s211 = sphi 0, %s209
      %s212 = sphi 0, %s211
      %s226 = sphi 0, %s212
      %s230 = sphi 0, %s230
      %s232 = sphi 0, %s230
      %s233 = sphi 0, %s232
      %s247 = sphi 0, %s233
      %s251 = sphi 0, %s251
      %s253 = sphi 0, %s251
      %s254 = sphi 0, %s253
      %s268 = sphi 0, %s254
      %s272 = sphi 0, %s272
      %s274 = sphi 0, %s272
      %s275 = sphi 0, %s274
      %s289 = sphi 0, %s275
      %s297 = sphi 0, %s299
      %s300 = sphi 0, %s297
      %s301 = sphi 0, %s300
      %s317 = sphi 0, %s301
    $region4: #{tpu_custom_call.1} parent=1 // loop_header_branch
      %33 = sbr.rel (%p31) target = $region8
    $region5: #{tpu_custom_call.1} parent=1 // loop_body
      %s35 = ssub.s32 %s30, 1
      %s36 = ssub.s32 %s30, 2
      %s43 = sadd.s32 1, %s38
      %p44 = scmp.ge.s32.totalorder %s43, 2
      %s45 = scalar_select %p44, 0, %s43
      %s46 = sadd.s32 1, %s37
      %s47 = scalar_select %p44, %s46, %s37
      %p48 = scmp.ge.s32.totalorder %s47, 2
      %s49 = scalar_select %p48, 0, %s47
      %s50 = ssub.s32 %s37, %s49
      %s51 = ssub.s32 %s38, %s45
      %s52 = sor.u32 %s50, %s51
      %p53 = scmp.eq.s32.totalorder %s52, 0
      %s55 = sadd.s32 %s54, 1
      %s56 = scalar_select %p53, %s54, %s55
      %p59 = pneg %p53
      %p60 = scmp.eq.s32.totalorder %s30, 3
      %p61 = por %p59, %p60
      %p62 = scmp.ne.s32.totalorder %s54, %s57
      %p63 = scmp.eq.s32.totalorder %s30, 0
      %p64 = por %p62, %p63
      %p65 = scmp.ne.s32.totalorder %s54, %s57
      %p66 = scmp.eq.s32.totalorder %s35, 3
      %p67 = por %p65, %p66
      %p68 = scmp.ne.s32.totalorder %s57, %s58
      %p69 = scmp.eq.s32.totalorder %s35, 0
      %p70 = por %p68, %p69
      %p71 = scmp.ne.s32.totalorder %s57, %s58
      %p72 = scmp.eq.s32.totalorder %s36, 3
      %p73 = por %p71, %p72
      %p75 = scmp.ne.s32.totalorder %s58, %s74
      %p76 = scmp.eq.s32.totalorder %s36, 0
      %p77 = por %p75, %p76
      %s78 = ssub.s32 %s37, %s49
      %p79 = scmp.eq.s32.totalorder %s78, 0
      %s81 = sadd.s32 %s80, 1
      %s82 = scalar_select %p79, %s80, %s81
      %p85 = pneg %p79
      %p86 = scmp.eq.s32.totalorder %s30, 3
      %p87 = por %p85, %p86
      %p88 = scmp.ne.s32.totalorder %s80, %s83
      %p89 = scmp.eq.s32.totalorder %s30, 0
      %p90 = por %p88, %p89
      %p91 = scmp.ne.s32.totalorder %s80, %s83
      %p92 = scmp.eq.s32.totalorder %s35, 3
      %p93 = por %p91, %p92
      %p94 = scmp.ne.s32.totalorder %s83, %s84
      %p95 = scmp.eq.s32.totalorder %s35, 0
      %p96 = por %p94, %p95
      %p97 = scmp.ne.s32.totalorder %s83, %s84
      %p98 = scmp.eq.s32.totalorder %s36, 3
      %p99 = por %p97, %p98
      %p101 = scmp.ne.s32.totalorder %s84, %s100
      %p102 = scmp.eq.s32.totalorder %s36, 0
      %p103 = por %p101, %p102
      %s105 = sadd.s32 %s104, 1
      %p108 = scmp.eq.s32.totalorder %s30, 3
      %p109 = scmp.ne.s32.totalorder %s104, %s106
      %p110 = scmp.eq.s32.totalorder %s30, 0
      %p111 = por %p109, %p110
      %p112 = scmp.ne.s32.totalorder %s104, %s106
      %p113 = scmp.eq.s32.totalorder %s35, 3
      %p114 = por %p112, %p113
      %p115 = scmp.ne.s32.totalorder %s106, %s107
      %p116 = scmp.eq.s32.totalorder %s35, 0
      %p117 = por %p115, %p116
      %p118 = scmp.ne.s32.totalorder %s106, %s107
      %p119 = scmp.eq.s32.totalorder %s36, 3
      %p120 = por %p118, %p119
      %p122 = scmp.ne.s32.totalorder %s107, %s121
      %p123 = scmp.eq.s32.totalorder %s36, 0
      %p124 = por %p122, %p123
      %s126 = sadd.s32 %s125, 1
      %p129 = scmp.eq.s32.totalorder %s30, 3
      %p130 = scmp.ne.s32.totalorder %s125, %s127
      %p131 = scmp.eq.s32.totalorder %s30, 0
      %p132 = por %p130, %p131
      %p133 = scmp.ne.s32.totalorder %s125, %s127
      %p134 = scmp.eq.s32.totalorder %s35, 3
      %p135 = por %p133, %p134
      %p136 = scmp.ne.s32.totalorder %s127, %s128
      %p137 = scmp.eq.s32.totalorder %s35, 0
      %p138 = por %p136, %p137
      %p139 = scmp.ne.s32.totalorder %s127, %s128
      %p140 = scmp.eq.s32.totalorder %s36, 3
      %p141 = por %p139, %p140
      %p143 = scmp.ne.s32.totalorder %s128, %s142
      %p144 = scmp.eq.s32.totalorder %s36, 0
      %p145 = por %p143, %p144
      %s147 = sadd.s32 %s146, 1
      %p150 = scmp.eq.s32.totalorder %s30, 3
      %p151 = scmp.ne.s32.totalorder %s146, %s148
      %p152 = scmp.eq.s32.totalorder %s30, 0
      %p153 = por %p151, %p152
      %p154 = scmp.ne.s32.totalorder %s146, %s148
      %p155 = scmp.eq.s32.totalorder %s35, 3
      %p156 = por %p154, %p155
      %p157 = scmp.ne.s32.totalorder %s148, %s149
      %p158 = scmp.eq.s32.totalorder %s35, 0
      %p159 = por %p157, %p158
      %p160 = scmp.ne.s32.totalorder %s148, %s149
      %p161 = scmp.eq.s32.totalorder %s36, 3
      %p162 = por %p160, %p161
      %p164 = scmp.ne.s32.totalorder %s149, %s163
      %p165 = scmp.eq.s32.totalorder %s36, 0
      %p166 = por %p164, %p165
      %s168 = sadd.s32 %s167, 1
      %p171 = scmp.eq.s32.totalorder %s30, 3
      %p172 = scmp.ne.s32.totalorder %s167, %s169
      %p173 = scmp.eq.s32.totalorder %s30, 0
      %p174 = por %p172, %p173
      %p175 = scmp.ne.s32.totalorder %s167, %s169
      %p176 = scmp.eq.s32.totalorder %s35, 3
      %p177 = por %p175, %p176
      %p178 = scmp.ne.s32.totalorder %s169, %s170
      %p179 = scmp.eq.s32.totalorder %s35, 0
      %p180 = por %p178, %p179
      %p181 = scmp.ne.s32.totalorder %s169, %s170
      %p182 = scmp.eq.s32.totalorder %s36, 3
      %p183 = por %p181, %p182
      %p185 = scmp.ne.s32.totalorder %s170, %s184
      %p186 = scmp.eq.s32.totalorder %s36, 0
      %p187 = por %p185, %p186
      %s189 = sadd.s32 %s188, 1
      %p192 = scmp.eq.s32.totalorder %s30, 3
      %p193 = scmp.ne.s32.totalorder %s188, %s190
      %p194 = scmp.eq.s32.totalorder %s30, 0
      %p195 = por %p193, %p194
      %p196 = scmp.ne.s32.totalorder %s188, %s190
      %p197 = scmp.eq.s32.totalorder %s35, 3
      %p198 = por %p196, %p197
      %p199 = scmp.ne.s32.totalorder %s190, %s191
      %p200 = scmp.eq.s32.totalorder %s35, 0
      %p201 = por %p199, %p200
      %p202 = scmp.ne.s32.totalorder %s190, %s191
      %p203 = scmp.eq.s32.totalorder %s36, 3
      %p204 = por %p202, %p203
      %p206 = scmp.ne.s32.totalorder %s191, %s205
      %p207 = scmp.eq.s32.totalorder %s36, 0
      %p208 = por %p206, %p207
      %s210 = sadd.s32 %s209, 1
      %p213 = scmp.eq.s32.totalorder %s30, 3
      %p214 = scmp.ne.s32.totalorder %s209, %s211
      %p215 = scmp.eq.s32.totalorder %s30, 0
      %p216 = por %p214, %p215
      %p217 = scmp.ne.s32.totalorder %s209, %s211
      %p218 = scmp.eq.s32.totalorder %s35, 3
      %p219 = por %p217, %p218
      %p220 = scmp.ne.s32.totalorder %s211, %s212
      %p221 = scmp.eq.s32.totalorder %s35, 0
      %p222 = por %p220, %p221
      %p223 = scmp.ne.s32.totalorder %s211, %s212
      %p224 = scmp.eq.s32.totalorder %s36, 3
      %p225 = por %p223, %p224
      %p227 = scmp.ne.s32.totalorder %s212, %s226
      %p228 = scmp.eq.s32.totalorder %s36, 0
      %p229 = por %p227, %p228
      %s231 = sadd.s32 %s230, 1
      %p234 = scmp.eq.s32.totalorder %s30, 3
      %p235 = scmp.ne.s32.totalorder %s230, %s232
      %p236 = scmp.eq.s32.totalorder %s30, 0
      %p237 = por %p235, %p236
      %p238 = scmp.ne.s32.totalorder %s230, %s232
      %p239 = scmp.eq.s32.totalorder %s35, 3
      %p240 = por %p238, %p239
      %p241 = scmp.ne.s32.totalorder %s232, %s233
      %p242 = scmp.eq.s32.totalorder %s35, 0
      %p243 = por %p241, %p242
      %p244 = scmp.ne.s32.totalorder %s232, %s233
      %p245 = scmp.eq.s32.totalorder %s36, 3
      %p246 = por %p244, %p245
      %p248 = scmp.ne.s32.totalorder %s233, %s247
      %p249 = scmp.eq.s32.totalorder %s36, 0
      %p250 = por %p248, %p249
      %s252 = sadd.s32 %s251, 1
      %p255 = scmp.eq.s32.totalorder %s30, 3
      %p256 = scmp.ne.s32.totalorder %s251, %s253
      %p257 = scmp.eq.s32.totalorder %s30, 0
      %p258 = por %p256, %p257
      %p259 = scmp.ne.s32.totalorder %s251, %s253
      %p260 = scmp.eq.s32.totalorder %s35, 3
      %p261 = por %p259, %p260
      %p262 = scmp.ne.s32.totalorder %s253, %s254
      %p263 = scmp.eq.s32.totalorder %s35, 0
      %p264 = por %p262, %p263
      %p265 = scmp.ne.s32.totalorder %s253, %s254
      %p266 = scmp.eq.s32.totalorder %s36, 3
      %p267 = por %p265, %p266
      %p269 = scmp.ne.s32.totalorder %s254, %s268
      %p270 = scmp.eq.s32.totalorder %s36, 0
      %p271 = por %p269, %p270
      %s273 = sadd.s32 %s272, 1
      %p276 = scmp.eq.s32.totalorder %s30, 3
      %p277 = scmp.ne.s32.totalorder %s272, %s274
      %p278 = scmp.eq.s32.totalorder %s30, 0
      %p279 = por %p277, %p278
      %p280 = scmp.ne.s32.totalorder %s272, %s274
      %p281 = scmp.eq.s32.totalorder %s35, 3
      %p282 = por %p280, %p281
      %p283 = scmp.ne.s32.totalorder %s274, %s275
      %p284 = scmp.eq.s32.totalorder %s35, 0
      %p285 = por %p283, %p284
      %p286 = scmp.ne.s32.totalorder %s274, %s275
      %p287 = scmp.eq.s32.totalorder %s36, 3
      %p288 = por %p286, %p287
      %p290 = scmp.ne.s32.totalorder %s275, %s289
      %p291 = scmp.eq.s32.totalorder %s36, 0
      %p292 = por %p290, %p291
      %s293 = ssub.s32 %s37, %s49
      %s294 = ssub.s32 %s38, %s45
      %s295 = sor.u32 %s293, %s294
      %p296 = scmp.eq.s32.totalorder %s295, 0
      %s298 = sadd.s32 %s297, 1
      %s299 = scalar_select %p296, %s297, %s298
      %p302 = pneg %p296
      %p303 = scmp.eq.s32.totalorder %s30, 3
      %p304 = por %p302, %p303
      %p305 = scmp.ne.s32.totalorder %s297, %s300
      %p306 = scmp.eq.s32.totalorder %s30, 0
      %p307 = por %p305, %p306
      %p308 = scmp.ne.s32.totalorder %s297, %s300
      %p309 = scmp.eq.s32.totalorder %s35, 3
      %p310 = por %p308, %p309
      %p311 = scmp.ne.s32.totalorder %s300, %s301
      %p312 = scmp.eq.s32.totalorder %s35, 0
      %p313 = por %p311, %p312
      %p314 = scmp.ne.s32.totalorder %s300, %s301
      %p315 = scmp.eq.s32.totalorder %s36, 3
      %p316 = por %p314, %p315
      %p318 = scmp.ne.s32.totalorder %s301, %s317
      %p319 = scmp.eq.s32.totalorder %s36, 0
      %p320 = por %p318, %p319
      %p321 = scmp.le.s32.totalorder 1, %s30
      %p322 = scmp.lt.s32.totalorder %s30, 5
      %p323 = pnand %p321, %p322
      %p324 = pneg %p323
      // Predicated region
      $region9: #{tpu_custom_call.1} parent=5 // pred_check
        _
      $region10: #{tpu_custom_call.1} parent=5 // pred_check_branch
        %326 = sbr.rel (%p323) target = $region12
      $region11: #{tpu_custom_call.1} parent=5 // pred_region
        %s327 = ssub.s32 %s30, 1
        // Predicated region
        $region13: #{tpu_custom_call.1} parent=11 // pred_check
          %p328 = pneg %p117
        $region14: #{tpu_custom_call.1} parent=11 // pred_check_branch
          %330 = sbr.rel (%p328) target = $region16
        $region15: #{tpu_custom_call.1} parent=11 // pred_region
          %s332 = ssub.s32 1024, 1024
          %333 = vsyncadd [#allocation9], %s332
          %s334 = sshll.u32 [#allocation10], 4
          %s335 = int_to_ptr.vmem [resolvable:$true] %s334
          %340 = dma.hbm_to_vmem [thread:$0]  %s2, 1024, %s335, [#allocation9], 64, 64, 4
        $region16: #{tpu_custom_call.1} parent=11 // pred_fallthru
          _
        // Predicated region
        $region17: #{tpu_custom_call.1} parent=11 // pred_check
          %p341 = pneg %p138
        $region18: #{tpu_custom_call.1} parent=11 // pred_check_branch
          %343 = sbr.rel (%p341) target = $region20
        $region19: #{tpu_custom_call.1} parent=11 // pred_region
          %s345 = ssub.s32 2048, 2048
          %346 = vsyncadd [#allocation12], %s345
          %s347 = sshll.u32 [#allocation11], 4
          %s348 = int_to_ptr.vmem [resolvable:$true] %s347
          %353 = dma.hbm_to_vmem [thread:$0]  %s3, 2048, %s348, [#allocation12], 128, 128, 8
        $region20: #{tpu_custom_call.1} parent=11 // pred_fallthru
          _
        // Predicated region
        $region21: #{tpu_custom_call.1} parent=11 // pred_check
          %p354 = pneg %p159
        $region22: #{tpu_custom_call.1} parent=11 // pred_check_branch
          %356 = sbr.rel (%p354) target = $region24
        $region23: #{tpu_custom_call.1} parent=11 // pred_region
          %s358 = ssub.s32 1024, 1024
          %359 = vsyncadd [#allocation12], %s358
          %s360 = sshll.u32 [#allocation13], 4
          %s361 = int_to_ptr.vmem [resolvable:$true] %s360
          %366 = dma.hbm_to_vmem [thread:$0]  %s4, 1024, %s361, [#allocation12], 64, 64, 4
        $region24: #{tpu_custom_call.1} parent=11 // pred_fallthru
          _
        // Predicated region
        $region25: #{tpu_custom_call.1} parent=11 // pred_check
          %p367 = pneg %p180
        $region26: #{tpu_custom_call.1} parent=11 // pred_check_branch
          %369 = sbr.rel (%p367) target = $region28
        $region27: #{tpu_custom_call.1} parent=11 // pred_region
          %s371 = ssub.s32 1024, 1024
          %372 = vsyncadd [#allocation15], %s371
          %s373 = sshll.u32 [#allocation14], 4
          %s374 = int_to_ptr.vmem [resolvable:$true] %s373
          %379 = dma.hbm_to_vmem [thread:$0]  %s5, 1024, %s374, [#allocation15], 64, 64, 4
        $region28: #{tpu_custom_call.1} parent=11 // pred_fallthru
          _
        // Predicated region
        $region29: #{tpu_custom_call.1} parent=11 // pred_check
          %p380 = pneg %p201
        $region30: #{tpu_custom_call.1} parent=11 // pred_check_branch
          %382 = sbr.rel (%p380) target = $region32
        $region31: #{tpu_custom_call.1} parent=11 // pred_region
          _
        $region32: #{tpu_custom_call.1} parent=11 // pred_fallthru
          _
        // Predicated region
        $region33: #{tpu_custom_call.1} parent=11 // pred_check
          %p383 = pneg %p222
        $region34: #{tpu_custom_call.1} parent=11 // pred_check_branch
          %385 = sbr.rel (%p383) target = $region36
        $region35: #{tpu_custom_call.1} parent=11 // pred_region
          %s387 = ssub.s32 1024, 1024
          %388 = vsyncadd [#allocation15], %s387
          %s389 = sshll.u32 [#allocation16], 4
          %s390 = int_to_ptr.vmem [resolvable:$true] %s389
          %395 = dma.hbm_to_vmem [thread:$0]  %s7, 1024, %s390, [#allocation15], 64, 64, 4
        $region36: #{tpu_custom_call.1} parent=11 // pred_fallthru
          _
        // Predicated region
        $region37: #{tpu_custom_call.1} parent=11 // pred_check
          %p396 = pneg %p243
        $region38: #{tpu_custom_call.1} parent=11 // pred_check_branch
          %398 = sbr.rel (%p396) target = $region40
        $region39: #{tpu_custom_call.1} parent=11 // pred_region
          _
        $region40: #{tpu_custom_call.1} parent=11 // pred_fallthru
          _
        // Predicated region
        $region41: #{tpu_custom_call.1} parent=11 // pred_check
          %p399 = pneg %p264
        $region42: #{tpu_custom_call.1} parent=11 // pred_check_branch
          %401 = sbr.rel (%p399) target = $region44
        $region43: #{tpu_custom_call.1} parent=11 // pred_region
          _
        $region44: #{tpu_custom_call.1} parent=11 // pred_fallthru
          _
        // Predicated region
        $region45: #{tpu_custom_call.1} parent=11 // pred_check
          %p402 = pneg %p285
        $region46: #{tpu_custom_call.1} parent=11 // pred_check_branch
          %404 = sbr.rel (%p402) target = $region48
        $region47: #{tpu_custom_call.1} parent=11 // pred_region
          _
        $region48: #{tpu_custom_call.1} parent=11 // pred_fallthru
          _
      $region12: #{tpu_custom_call.1} parent=5 // pred_fallthru
        _
      %p405 = scmp.lt.s32.totalorder %s30, 4
      // Predicated region
      $region49: #{tpu_custom_call.1} parent=5 // pred_check
        %p406 = pneg %p405
      $region50: #{tpu_custom_call.1} parent=5 // pred_check_branch
        %408 = sbr.rel (%p406) target = $region52
      $region51: #{tpu_custom_call.1} parent=5 // pred_region
        // Predicated region
        $region53: #{tpu_custom_call.1} parent=51 // pred_check
          %p409 = pneg %p64
        $region54: #{tpu_custom_call.1} parent=51 // pred_check_branch
          %411 = sbr.rel (%p409) target = $region56
        $region55: #{tpu_custom_call.1} parent=51 // pred_region
          %s412 = sand.u32 %s54, 1
          %s413 = scalar_lea.sflag [#allocation6], %s412
          %s414 = sand.u32 %s54, 1
          %s415 = smul.addr %s414, 128
          %s416 = scalar_lea.vmem [#allocation5], %s415
          %s417 = smul.u32 16, %s38
          %s419 = ssub.s32 2048, 2048
          %420 = vsyncadd %s413, %s419
          %s421 = smul.addr %s37, 32
          %s422 = sadd.s32 %s417, %s421
          %s423 = smul.addr %s422, 128
          %s424 = scalar_lea.hbm %s0, %s423
          %s425 = sshll.u32 %s416, 4
          %s426 = int_to_ptr.vmem [resolvable:$true] %s425
          %431 = dma.hbm_to_vmem [thread:$0]  %s424, 2048, %s426, %s413, 128, 128, 8
        $region56: #{tpu_custom_call.1} parent=51 // pred_fallthru
          _
        // Predicated region
        $region57: #{tpu_custom_call.1} parent=51 // pred_check
          %p432 = pneg %p90
        $region58: #{tpu_custom_call.1} parent=51 // pred_check_branch
          %434 = sbr.rel (%p432) target = $region60
        $region59: #{tpu_custom_call.1} parent=51 // pred_region
          %s435 = sand.u32 %s30, 1
          %s436 = scalar_lea.sflag [#allocation9], %s435
          %s437 = sand.u32 %s80, 1
          %s438 = smul.addr %s437, 256
          %s439 = scalar_lea.vmem [#allocation8], %s438
          %s441 = ssub.s32 4096, 4096
          %442 = vsyncadd %s436, %s441
          %s443 = smul.addr %s37, 32
          %s444 = smul.addr %s443, 128
          %s445 = scalar_lea.hbm %s1, %s444
          %s446 = sshll.u32 %s439, 4
          %s447 = int_to_ptr.vmem [resolvable:$true] %s446
          %452 = dma.hbm_to_vmem [thread:$0]  %s445, 4096, %s447, %s436, 128, 128, 8
        $region60: #{tpu_custom_call.1} parent=51 // pred_fallthru
          _
      $region52: #{tpu_custom_call.1} parent=5 // pred_fallthru
        _
      %p453 = scmp.le.s32.totalorder 1, %s30
      %p454 = scmp.lt.s32.totalorder %s30, 5
      %p455 = pnand %p453, %p454
      %p456 = pneg %p455
      // Predicated region
      $region61: #{tpu_custom_call.1} parent=5 // pred_check
        _
      $region62: #{tpu_custom_call.1} parent=5 // pred_check_branch
        %458 = sbr.rel (%p455) target = $region64
      $region63: #{tpu_custom_call.1} parent=5 // pred_region
        %s459 = ssub.s32 %s30, 1
        %s460 = sand.u32 %s57, 1
        %s461 = scalar_lea.sflag [#allocation6], %s460
        %s462 = sand.u32 %s57, 1
        %s463 = smul.addr %s462, 128
        %s464 = scalar_lea.vmem [#allocation5], %s463
        // Predicated region
        $region65: #{tpu_custom_call.1} parent=63 // pred_check
          %p465 = pneg %p70
        $region66: #{tpu_custom_call.1} parent=63 // pred_check_branch
          %467 = sbr.rel (%p465) target = $region68
        $region67: #{tpu_custom_call.1} parent=63 // pred_region
          %468 = dma.done %s461, 2048
        $region68: #{tpu_custom_call.1} parent=63 // pred_fallthru
          _
        %s469 = sand.u32 %s35, 1
        %s470 = scalar_lea.sflag [#allocation9], %s469
        %s471 = sand.u32 %s83, 1
        %s472 = smul.addr %s471, 256
        %s473 = scalar_lea.vmem [#allocation8], %s472
        // Predicated region
        $region69: #{tpu_custom_call.1} parent=63 // pred_check
          %p474 = pneg %p96
        $region70: #{tpu_custom_call.1} parent=63 // pred_check_branch
          %476 = sbr.rel (%p474) target = $region72
        $region71: #{tpu_custom_call.1} parent=63 // pred_region
          %477 = dma.done %s470, 4096
        $region72: #{tpu_custom_call.1} parent=63 // pred_fallthru
          _
        // Predicated region
        $region73: #{tpu_custom_call.1} parent=63 // pred_check
          %p478 = pneg %p117
        $region74: #{tpu_custom_call.1} parent=63 // pred_check_branch
          %480 = sbr.rel (%p478) target = $region76
        $region75: #{tpu_custom_call.1} parent=63 // pred_region
          %481 = dma.done [#allocation9], 1024
        $region76: #{tpu_custom_call.1} parent=63 // pred_fallthru
          _
        // Predicated region
        $region77: #{tpu_custom_call.1} parent=63 // pred_check
          %p482 = pneg %p138
        $region78: #{tpu_custom_call.1} parent=63 // pred_check_branch
          %484 = sbr.rel (%p482) target = $region80
        $region79: #{tpu_custom_call.1} parent=63 // pred_region
          %485 = dma.done [#allocation12], 2048
        $region80: #{tpu_custom_call.1} parent=63 // pred_fallthru
          _
        // Predicated region
        $region81: #{tpu_custom_call.1} parent=63 // pred_check
          %p486 = pneg %p159
        $region82: #{tpu_custom_call.1} parent=63 // pred_check_branch
          %488 = sbr.rel (%p486) target = $region84
        $region83: #{tpu_custom_call.1} parent=63 // pred_region
          %489 = dma.done [#allocation12], 1024
        $region84: #{tpu_custom_call.1} parent=63 // pred_fallthru
          _
        // Predicated region
        $region85: #{tpu_custom_call.1} parent=63 // pred_check
          %p490 = pneg %p180
        $region86: #{tpu_custom_call.1} parent=63 // pred_check_branch
          %492 = sbr.rel (%p490) target = $region88
        $region87: #{tpu_custom_call.1} parent=63 // pred_region
          %493 = dma.done [#allocation15], 1024
        $region88: #{tpu_custom_call.1} parent=63 // pred_fallthru
          _
        // Predicated region
        $region89: #{tpu_custom_call.1} parent=63 // pred_check
          %p494 = pneg %p222
        $region90: #{tpu_custom_call.1} parent=63 // pred_check_branch
          %496 = sbr.rel (%p494) target = $region92
        $region91: #{tpu_custom_call.1} parent=63 // pred_region
          %497 = dma.done [#allocation15], 1024
        $region92: #{tpu_custom_call.1} parent=63 // pred_fallthru
          _
        %s498 = sand.u32 %s57, 1
        %s499 = scalar_lea.sflag [#allocation6], %s498
        %s500 = sand.u32 %s57, 1
        %s501 = smul.addr %s500, 128
        %s502 = scalar_lea.vmem [#allocation5], %s501
        %p503 = pneg %p70
        %p504 = pneg %p67
        %s505 = sand.u32 %s35, 1
        %s506 = scalar_lea.sflag [#allocation9], %s505
        %s507 = sand.u32 %s83, 1
        %s508 = smul.addr %s507, 256
        %s509 = scalar_lea.vmem [#allocation8], %s508
        %p510 = pneg %p96
        %p511 = pneg %p93
        %p512 = pneg %p117
        %p513 = pneg %p114
        %p514 = pneg %p138
        %p515 = pneg %p135
        %p516 = pneg %p159
        %p517 = pneg %p156
        %p518 = pneg %p180
        %p519 = pneg %p177
        %p520 = pneg %p201
        %p521 = pneg %p198
        %p522 = pneg %p222
        %p523 = pneg %p219
        %p524 = pneg %p243
        %p525 = pneg %p240
        %p526 = pneg %p264
        %p527 = pneg %p261
        %p528 = pneg %p285
        %p529 = pneg %p282
        %p530 = pneg %p313
        %p531 = pneg %p310
        %s532 = sand.u32 %s300, 1
        %s533 = scalar_lea.sflag [#allocation7], %s532
        %s534 = sand.u32 %s300, 1
        %s535 = scalar_lea.vmem [#allocation17], %s534
        %s536 = smul.u32 16, %s40
        %p538 = scmp.eq.s32.totalorder %s40, 0
        // Predicated region
        $region93: #{tpu_custom_call.1} parent=63 // pred_check
          %p539 = pneg %p538
        $region94: #{tpu_custom_call.1} parent=63 // pred_check_branch
          %541 = sbr.rel (%p539) target = $region96
        $region95: #{tpu_custom_call.1} parent=63 // pred_region
          %v542 = vld [vmem:[%s473] sm:$0xff]
          %v543 = vld [vmem:[%s473 + $0x8] sm:$0xff]
          %v544 = vld [vmem:[%s473 + $0x10] sm:$0xff]
          %v545 = vld [vmem:[%s473 + $0x18] sm:$0xff]
          %v546 = vld [vmem:[%s473 + $0x20] sm:$0xff]
          %v547 = vld [vmem:[%s473 + $0x28] sm:$0xff]
          %v548 = vld [vmem:[%s473 + $0x30] sm:$0xff]
          %v549 = vld [vmem:[%s473 + $0x38] sm:$0xff]
          %v550 = vld [vmem:[%s473 + $0x40] sm:$0xff]
          %v551 = vld [vmem:[%s473 + $0x48] sm:$0xff]
          %v552 = vld [vmem:[%s473 + $0x50] sm:$0xff]
          %v553 = vld [vmem:[%s473 + $0x58] sm:$0xff]
          %v554 = vld [vmem:[%s473 + $0x60] sm:$0xff]
          %v555 = vld [vmem:[%s473 + $0x68] sm:$0xff]
          %v556 = vld [vmem:[%s473 + $0x70] sm:$0xff]
          %v557 = vld [vmem:[%s473 + $0x78] sm:$0xff]
          %v558 = vld [vmem:[%s473 + $0x80] sm:$0xff]
          %v559 = vld [vmem:[%s473 + $0x88] sm:$0xff]
          %v560 = vld [vmem:[%s473 + $0x90] sm:$0xff]
          %v561 = vld [vmem:[%s473 + $0x98] sm:$0xff]
          %v562 = vld [vmem:[%s473 + $0xa0] sm:$0xff]
          %v563 = vld [vmem:[%s473 + $0xa8] sm:$0xff]
          %v564 = vld [vmem:[%s473 + $0xb0] sm:$0xff]
          %v565 = vld [vmem:[%s473 + $0xb8] sm:$0xff]
          %v566 = vld [vmem:[%s473 + $0xc0] sm:$0xff]
          %v567 = vld [vmem:[%s473 + $0xc8] sm:$0xff]
          %v568 = vld [vmem:[%s473 + $0xd0] sm:$0xff]
          %v569 = vld [vmem:[%s473 + $0xd8] sm:$0xff]
          %v570 = vld [vmem:[%s473 + $0xe0] sm:$0xff]
          %v571 = vld [vmem:[%s473 + $0xe8] sm:$0xff]
          %v572 = vld [vmem:[%s473 + $0xf0] sm:$0xff]
          %v573 = vld [vmem:[%s473 + $0xf8] sm:$0xff]
          %v574 = vpack.c.bf16 %v543, %v542
          %v575 = vpack.c.bf16 %v545, %v544
          %v576 = vpack.c.bf16 %v547, %v546
          %v577 = vpack.c.bf16 %v549, %v548
          %v578 = vpack.c.bf16 %v551, %v550
          %v579 = vpack.c.bf16 %v553, %v552
          %v580 = vpack.c.bf16 %v555, %v554
          %v581 = vpack.c.bf16 %v557, %v556
          %v582 = vpack.c.bf16 %v559, %v558
          %v583 = vpack.c.bf16 %v561, %v560
          %v584 = vpack.c.bf16 %v563, %v562
          %v585 = vpack.c.bf16 %v565, %v564
          %v586 = vpack.c.bf16 %v567, %v566
          %v587 = vpack.c.bf16 %v569, %v568
          %v588 = vpack.c.bf16 %v571, %v570
          %v589 = vpack.c.bf16 %v573, %v572
          %v590 = vld [vmem:[#allocation11] sm:$0xff]
          %v591 = vld [vmem:[#allocation11 + $0x8] sm:$0xff]
          %v592 = vld [vmem:[#allocation11 + $0x10] sm:$0xff]
          %v593 = vld [vmem:[#allocation11 + $0x18] sm:$0xff]
          %v594 = vld [vmem:[#allocation11 + $0x20] sm:$0xff]
          %v595 = vld [vmem:[#allocation11 + $0x28] sm:$0xff]
          %v596 = vld [vmem:[#allocation11 + $0x30] sm:$0xff]
          %v597 = vld [vmem:[#allocation11 + $0x38] sm:$0xff]
          %v598 = vld [vmem:[#allocation11 + $0x40] sm:$0xff]
          %v599 = vld [vmem:[#allocation11 + $0x48] sm:$0xff]
          %v600 = vld [vmem:[#allocation11 + $0x50] sm:$0xff]
          %v601 = vld [vmem:[#allocation11 + $0x58] sm:$0xff]
          %v602 = vld [vmem:[#allocation11 + $0x60] sm:$0xff]
          %v603 = vld [vmem:[#allocation11 + $0x68] sm:$0xff]
          %v604 = vld [vmem:[#allocation11 + $0x70] sm:$0xff]
          %v605 = vld [vmem:[#allocation11 + $0x78] sm:$0xff]
          %v622 = vunpack.c.l.b16 %v590
          %v623 = vunpack.c.h.b16 %v590
          %v624 = vunpack.c.l.b16 %v591
          %v625 = vunpack.c.h.b16 %v591
          %v626 = vunpack.c.l.b16 %v592
          %v627 = vunpack.c.h.b16 %v592
          %v628 = vunpack.c.l.b16 %v593
          %v629 = vunpack.c.h.b16 %v593
          %v630 = vunpack.c.l.b16 %v594
          %v631 = vunpack.c.h.b16 %v594
          %v632 = vunpack.c.l.b16 %v595
          %v633 = vunpack.c.h.b16 %v595
          %v634 = vunpack.c.l.b16 %v596
          %v635 = vunpack.c.h.b16 %v596
          %v636 = vunpack.c.l.b16 %v597
          %v637 = vunpack.c.h.b16 %v597
          %v638 = vunpack.c.l.b16 %v598
          %v639 = vunpack.c.h.b16 %v598
          %v640 = vunpack.c.l.b16 %v599
          %v641 = vunpack.c.h.b16 %v599
          %v642 = vunpack.c.l.b16 %v600
          %v643 = vunpack.c.h.b16 %v600
          %v644 = vunpack.c.l.b16 %v601
          %v645 = vunpack.c.h.b16 %v601
          %v646 = vunpack.c.l.b16 %v602
          %v647 = vunpack.c.h.b16 %v602
          %v648 = vunpack.c.l.b16 %v603
          %v649 = vunpack.c.h.b16 %v603
          %v650 = vunpack.c.l.b16 %v604
          %v651 = vunpack.c.h.b16 %v604
          %v652 = vunpack.c.l.b16 %v605
          %v653 = vunpack.c.h.b16 %v605
          %v654 = vpack.c.b16 %v624, %v622
          %v655 = vpack.c.b16 %v625, %v623
          %v656 = vpack.c.b16 %v628, %v626
          %v657 = vpack.c.b16 %v629, %v627
          %v658 = vpack.c.b16 %v632, %v630
          %v659 = vpack.c.b16 %v633, %v631
          %v660 = vpack.c.b16 %v636, %v634
          %v661 = vpack.c.b16 %v637, %v635
          %v662 = vpack.c.b16 %v640, %v638
          %v663 = vpack.c.b16 %v641, %v639
          %v664 = vpack.c.b16 %v644, %v642
          %v665 = vpack.c.b16 %v645, %v643
          %v666 = vpack.c.b16 %v648, %v646
          %v667 = vpack.c.b16 %v649, %v647
          %v668 = vpack.c.b16 %v652, %v650
          %v669 = vpack.c.b16 %v653, %v651
          %686 = vmatprep.subr.bf16.mxu0 %v655
          %687 = vmatpush1.bf16.msra.mxu0 %v654
          %688 = vmatprep.subr.bf16.mxu0 %v657
          %689 = vmatpush1.bf16.msra.mxu0 %v656
          %690 = vmatprep.subr.bf16.mxu0 %v659
          %691 = vmatpush1.bf16.msra.mxu0 %v658
          %692 = vmatprep.subr.bf16.mxu0 %v661
          %693 = vmatpush1.bf16.msra.mxu0 %v660
          %694 = vmatprep.subr.bf16.mxu0 %v663
          %695 = vmatpush1.bf16.msra.mxu0 %v662
          %696 = vmatprep.subr.bf16.mxu0 %v665
          %697 = vmatpush1.bf16.msra.mxu0 %v664
          %698 = vmatprep.subr.bf16.mxu0 %v667
          %699 = vmatpush1.bf16.msra.mxu0 %v666
          %700 = vmatprep.subr.bf16.mxu0 %v669
          %701 = vmatpush1.bf16.msra.mxu0 %v668
          %702 = vmatprep.subr.bf16.mxu0 0
          %703 = vmatpush1.bf16.msra.mxu0 0
          %704 = vmatprep.subr.bf16.mxu0 0
          %705 = vmatpush1.bf16.msra.mxu0 0
          %706 = vmatprep.subr.bf16.mxu0 0
          %707 = vmatpush1.bf16.msra.mxu0 0
          %708 = vmatprep.subr.bf16.mxu0 0
          %709 = vmatpush1.bf16.msra.mxu0 0
          %710 = vmatprep.subr.bf16.mxu0 0
          %711 = vmatpush1.bf16.msra.mxu0 0
          %712 = vmatprep.subr.bf16.mxu0 0
          %713 = vmatpush1.bf16.msra.mxu0 0
          %714 = vmatprep.subr.bf16.mxu0 0
          %715 = vmatpush1.bf16.msra.mxu0 0
          %716 = vmatprep.subr.bf16.mxu0 0
          %717 = vmatpush1.bf16.msra.mxu0 0
          %718 = vmatprep.mubr.bf16.mxu0 0
          %719 = vmatmul.mubr.bf16.gmra.mrb[0].mxu0 %v574
          %v720 = vpop.f32.mrb[0].mxu0
          %v721 = vadd.f32 0.0, %v720
          %v722 = vpop.f32.mrb[0].mxu0
          %v723 = vadd.f32 0.0, %v722
          %v724 = vpop.f32.mrb[0].mxu0
          %v725 = vadd.f32 0.0, %v724
          %v726 = vpop.f32.mrb[0].mxu0
          %v727 = vadd.f32 0.0, %v726
          %728 = vmatprep.mubr.bf16.mxu0 0
          %729 = vmatmul.mubr.bf16.gmra.mrb[0].mxu0 %v575
          %v730 = vpop.f32.mrb[0].mxu0
          %v731 = vadd.f32 0.0, %v730
          %v732 = vpop.f32.mrb[0].mxu0
          %v733 = vadd.f32 0.0, %v732
          %v734 = vpop.f32.mrb[0].mxu0
          %v735 = vadd.f32 0.0, %v734
          %v736 = vpop.f32.mrb[0].mxu0
          %v737 = vadd.f32 0.0, %v736
          %738 = vmatprep.mubr.bf16.mxu0 0
          %739 = vmatmul.mubr.bf16.gmra.mrb[0].mxu0 %v576
          %v740 = vpop.f32.mrb[0].mxu0
          %v741 = vadd.f32 0.0, %v740
          %v742 = vpop.f32.mrb[0].mxu0
          %v743 = vadd.f32 0.0, %v742
          %v744 = vpop.f32.mrb[0].mxu0
          %v745 = vadd.f32 0.0, %v744
          %v746 = vpop.f32.mrb[0].mxu0
          %v747 = vadd.f32 0.0, %v746
          %748 = vmatprep.mubr.bf16.mxu0 0
          %749 = vmatmul.mubr.bf16.gmra.mrb[0].mxu0 %v577
          %v750 = vpop.f32.mrb[0].mxu0
          %v751 = vadd.f32 0.0, %v750
          %v752 = vpop.f32.mrb[0].mxu0
          %v753 = vadd.f32 0.0, %v752
          %v754 = vpop.f32.mrb[0].mxu0
          %v755 = vadd.f32 0.0, %v754
          %v756 = vpop.f32.mrb[0].mxu0
          %v757 = vadd.f32 0.0, %v756
          %758 = vmatprep.mubr.bf16.mxu0 0
          %759 = vmatmul.mubr.bf16.gmra.mrb[0].mxu0 %v578
          %v760 = vpop.f32.mrb[0].mxu0
          %v761 = vadd.f32 0.0, %v760
          %v762 = vpop.f32.mrb[0].mxu0
          %v763 = vadd.f32 0.0, %v762
          %v764 = vpop.f32.mrb[0].mxu0
          %v765 = vadd.f32 0.0, %v764
          %v766 = vpop.f32.mrb[0].mxu0
          %v767 = vadd.f32 0.0, %v766
          %768 = vmatprep.mubr.bf16.mxu0 0
          %769 = vmatmul.mubr.bf16.gmra.mrb[0].mxu0 %v579
          %v770 = vpop.f32.mrb[0].mxu0
          %v771 = vadd.f32 0.0, %v770
          %v772 = vpop.f32.mrb[0].mxu0
          %v773 = vadd.f32 0.0, %v772
          %v774 = vpop.f32.mrb[0].mxu0
          %v775 = vadd.f32 0.0, %v774
          %v776 = vpop.f32.mrb[0].mxu0
          %v777 = vadd.f32 0.0, %v776
          %778 = vmatprep.mubr.bf16.mxu0 0
          %779 = vmatmul.mubr.bf16.gmra.mrb[0].mxu0 %v580
          %v780 = vpop.f32.mrb[0].mxu0
          %v781 = vadd.f32 0.0, %v780
          %v782 = vpop.f32.mrb[0].mxu0
          %v783 = vadd.f32 0.0, %v782
          %v784 = vpop.f32.mrb[0].mxu0
          %v785 = vadd.f32 0.0, %v784
          %v786 = vpop.f32.mrb[0].mxu0
          %v787 = vadd.f32 0.0, %v786
          %788 = vmatprep.mubr.bf16.mxu0 0
          %789 = vmatmul.mubr.bf16.gmra.mrb[0].mxu0 %v581
          %v790 = vpop.f32.mrb[0].mxu0
          %v791 = vadd.f32 0.0, %v790
          %v792 = vpop.f32.mrb[0].mxu0
          %v793 = vadd.f32 0.0, %v792
          %v794 = vpop.f32.mrb[0].mxu0
          %v795 = vadd.f32 0.0, %v794
          %v796 = vpop.f32.mrb[0].mxu0
          %v797 = vadd.f32 0.0, %v796
          %798 = vmatprep.mubr.bf16.mxu0 0
          %799 = vmatmul.mubr.bf16.gmra.mrb[0].mxu0 %v582
          %v800 = vpop.f32.mrb[0].mxu0
          %v801 = vadd.f32 0.0, %v800
          %v802 = vpop.f32.mrb[0].mxu0
          %v803 = vadd.f32 0.0, %v802
          %v804 = vpop.f32.mrb[0].mxu0
          %v805 = vadd.f32 0.0, %v804
          %v806 = vpop.f32.mrb[0].mxu0
          %v807 = vadd.f32 0.0, %v806
          %808 = vmatprep.mubr.bf16.mxu0 0
          %809 = vmatmul.mubr.bf16.gmra.mrb[0].mxu0 %v583
          %v810 = vpop.f32.mrb[0].mxu0
          %v811 = vadd.f32 0.0, %v810
          %v812 = vpop.f32.mrb[0].mxu0
          %v813 = vadd.f32 0.0, %v812
          %v814 = vpop.f32.mrb[0].mxu0
          %v815 = vadd.f32 0.0, %v814
          %v816 = vpop.f32.mrb[0].mxu0
          %v817 = vadd.f32 0.0, %v816
          %818 = vmatprep.mubr.bf16.mxu0 0
          %819 = vmatmul.mubr.bf16.gmra.mrb[0].mxu0 %v584
          %v820 = vpop.f32.mrb[0].mxu0
          %v821 = vadd.f32 0.0, %v820
          %v822 = vpop.f32.mrb[0].mxu0
          %v823 = vadd.f32 0.0, %v822
          %v824 = vpop.f32.mrb[0].mxu0
          %v825 = vadd.f32 0.0, %v824
          %v826 = vpop.f32.mrb[0].mxu0
          %v827 = vadd.f32 0.0, %v826
          %828 = vmatprep.mubr.bf16.mxu0 0
          %829 = vmatmul.mubr.bf16.gmra.mrb[0].mxu0 %v585
          %v830 = vpop.f32.mrb[0].mxu0
          %v831 = vadd.f32 0.0, %v830
          %v832 = vpop.f32.mrb[0].mxu0
          %v833 = vadd.f32 0.0, %v832
          %v834 = vpop.f32.mrb[0].mxu0
          %v835 = vadd.f32 0.0, %v834
          %v836 = vpop.f32.mrb[0].mxu0
          %v837 = vadd.f32 0.0, %v836
          %838 = vmatprep.mubr.bf16.mxu0 0
          %839 = vmatmul.mubr.bf16.gmra.mrb[0].mxu0 %v586
          %v840 = vpop.f32.mrb[0].mxu0
          %v841 = vadd.f32 0.0, %v840
          %v842 = vpop.f32.mrb[0].mxu0
          %v843 = vadd.f32 0.0, %v842
          %v844 = vpop.f32.mrb[0].mxu0
          %v845 = vadd.f32 0.0, %v844
          %v846 = vpop.f32.mrb[0].mxu0
          %v847 = vadd.f32 0.0, %v846
          %848 = vmatprep.mubr.bf16.mxu0 0
          %849 = vmatmul.mubr.bf16.gmra.mrb[0].mxu0 %v587
          %v850 = vpop.f32.mrb[0].mxu0
          %v851 = vadd.f32 0.0, %v850
          %v852 = vpop.f32.mrb[0].mxu0
          %v853 = vadd.f32 0.0, %v852
          %v854 = vpop.f32.mrb[0].mxu0
          %v855 = vadd.f32 0.0, %v854
          %v856 = vpop.f32.mrb[0].mxu0
          %v857 = vadd.f32 0.0, %v856
          %858 = vmatprep.mubr.bf16.mxu0 0
          %859 = vmatmul.mubr.bf16.gmra.mrb[0].mxu0 %v588
          %v860 = vpop.f32.mrb[0].mxu0
          %v861 = vadd.f32 0.0, %v860
          %v862 = vpop.f32.mrb[0].mxu0
          %v863 = vadd.f32 0.0, %v862
          %v864 = vpop.f32.mrb[0].mxu0
          %v865 = vadd.f32 0.0, %v864
          %v866 = vpop.f32.mrb[0].mxu0
          %v867 = vadd.f32 0.0, %v866
          %868 = vmatprep.mubr.bf16.mxu0 0
          %869 = vmatmul.mubr.bf16.gmra.mrb[0].mxu0 %v589
          %v870 = vpop.f32.mrb[0].mxu0
          %v871 = vadd.f32 0.0, %v870
          %v872 = vpop.f32.mrb[0].mxu0
          %v873 = vadd.f32 0.0, %v872
          %v874 = vpop.f32.mrb[0].mxu0
          %v875 = vadd.f32 0.0, %v874
          %v876 = vpop.f32.mrb[0].mxu0
          %v877 = vadd.f32 0.0, %v876
          %878 = vdwg.mxu0
          %v879 = vpack.c.bf16 %v725, %v721
          %v880 = vpack.c.bf16 %v735, %v731
          %v881 = vpack.c.bf16 %v745, %v741
          %v882 = vpack.c.bf16 %v755, %v751
          %v883 = vpack.c.bf16 %v765, %v761
          %v884 = vpack.c.bf16 %v775, %v771
          %v885 = vpack.c.bf16 %v785, %v781
          %v886 = vpack.c.bf16 %v795, %v791
          %v887 = vpack.c.bf16 %v805, %v801
          %v888 = vpack.c.bf16 %v815, %v811
          %v889 = vpack.c.bf16 %v825, %v821
          %v890 = vpack.c.bf16 %v835, %v831
          %v891 = vpack.c.bf16 %v845, %v841
          %v892 = vpack.c.bf16 %v855, %v851
          %v893 = vpack.c.bf16 %v865, %v861
          %v894 = vpack.c.bf16 %v875, %v871
          %895 = vst [vmem:[#allocation2] sm:$0xff] %v879
          %896 = vst [vmem:[#allocation2 + $0x8] sm:$0xff] %v880
          %897 = vst [vmem:[#allocation2 + $0x10] sm:$0xff] %v881
          %898 = vst [vmem:[#allocation2 + $0x18] sm:$0xff] %v882
          %899 = vst [vmem:[#allocation2 + $0x20] sm:$0xff] %v883
          %900 = vst [vmem:[#allocation2 + $0x28] sm:$0xff] %v884
          %901 = vst [vmem:[#allocation2 + $0x30] sm:$0xff] %v885
          %902 = vst [vmem:[#allocation2 + $0x38] sm:$0xff] %v886
          %903 = vst [vmem:[#allocation2 + $0x40] sm:$0xff] %v887
          %904 = vst [vmem:[#allocation2 + $0x48] sm:$0xff] %v888
          %905 = vst [vmem:[#allocation2 + $0x50] sm:$0xff] %v889
          %906 = vst [vmem:[#allocation2 + $0x58] sm:$0xff] %v890
          %907 = vst [vmem:[#allocation2 + $0x60] sm:$0xff] %v891
          %908 = vst [vmem:[#allocation2 + $0x68] sm:$0xff] %v892
          %909 = vst [vmem:[#allocation2 + $0x70] sm:$0xff] %v893
          %910 = vst [vmem:[#allocation2 + $0x78] sm:$0xff] %v894
          %v911 = vpack.c.bf16 %v727, %v723
          %v912 = vpack.c.bf16 %v737, %v733
          %v913 = vpack.c.bf16 %v747, %v743
          %v914 = vpack.c.bf16 %v757, %v753
          %v915 = vpack.c.bf16 %v767, %v763
          %v916 = vpack.c.bf16 %v777, %v773
          %v917 = vpack.c.bf16 %v787, %v783
          %v918 = vpack.c.bf16 %v797, %v793
          %v919 = vpack.c.bf16 %v807, %v803
          %v920 = vpack.c.bf16 %v817, %v813
          %v921 = vpack.c.bf16 %v827, %v823
          %v922 = vpack.c.bf16 %v837, %v833
          %v923 = vpack.c.bf16 %v847, %v843
          %v924 = vpack.c.bf16 %v857, %v853
          %v925 = vpack.c.bf16 %v867, %v863
          %v926 = vpack.c.bf16 %v877, %v873
          %927 = vst [vmem:[#allocation3] sm:$0xff] %v911
          %928 = vst [vmem:[#allocation3 + $0x8] sm:$0xff] %v912
          %929 = vst [vmem:[#allocation3 + $0x10] sm:$0xff] %v913
          %930 = vst [vmem:[#allocation3 + $0x18] sm:$0xff] %v914
          %931 = vst [vmem:[#allocation3 + $0x20] sm:$0xff] %v915
          %932 = vst [vmem:[#allocation3 + $0x28] sm:$0xff] %v916
          %933 = vst [vmem:[#allocation3 + $0x30] sm:$0xff] %v917
          %934 = vst [vmem:[#allocation3 + $0x38] sm:$0xff] %v918
          %935 = vst [vmem:[#allocation3 + $0x40] sm:$0xff] %v919
          %936 = vst [vmem:[#allocation3 + $0x48] sm:$0xff] %v920
          %937 = vst [vmem:[#allocation3 + $0x50] sm:$0xff] %v921
          %938 = vst [vmem:[#allocation3 + $0x58] sm:$0xff] %v922
          %939 = vst [vmem:[#allocation3 + $0x60] sm:$0xff] %v923
          %940 = vst [vmem:[#allocation3 + $0x68] sm:$0xff] %v924
          %941 = vst [vmem:[#allocation3 + $0x70] sm:$0xff] %v925
          %942 = vst [vmem:[#allocation3 + $0x78] sm:$0xff] %v926
        $region96: #{tpu_custom_call.1} parent=63 // pred_fallthru
          _
        %v943 = vld [vmem:[%s464] sm:$0xff]
        %v944 = vld [vmem:[%s464 + $0x8] sm:$0xff]
        %v945 = vld [vmem:[%s464 + $0x10] sm:$0xff]
        %v946 = vld [vmem:[%s464 + $0x18] sm:$0xff]
        %v947 = vld [vmem:[%s464 + $0x20] sm:$0xff]
        %v948 = vld [vmem:[%s464 + $0x28] sm:$0xff]
        %v949 = vld [vmem:[%s464 + $0x30] sm:$0xff]
        %v950 = vld [vmem:[%s464 + $0x38] sm:$0xff]
        %v951 = vld [vmem:[%s464 + $0x40] sm:$0xff]
        %v952 = vld [vmem:[%s464 + $0x48] sm:$0xff]
        %v953 = vld [vmem:[%s464 + $0x50] sm:$0xff]
        %v954 = vld [vmem:[%s464 + $0x58] sm:$0xff]
        %v955 = vld [vmem:[%s464 + $0x60] sm:$0xff]
        %v956 = vld [vmem:[%s464 + $0x68] sm:$0xff]
        %v957 = vld [vmem:[%s464 + $0x70] sm:$0xff]
        %v958 = vld [vmem:[%s464 + $0x78] sm:$0xff]
        %v959 = vpack.c.bf16 %v944, %v943
        %v960 = vpack.c.bf16 %v946, %v945
        %v961 = vpack.c.bf16 %v948, %v947
        %v962 = vpack.c.bf16 %v950, %v949
        %v963 = vpack.c.bf16 %v952, %v951
        %v964 = vpack.c.bf16 %v954, %v953
        %v965 = vpack.c.bf16 %v956, %v955
        %v966 = vpack.c.bf16 %v958, %v957
        %v967 = vld [vmem:[#allocation10] sm:$0xf]
        %v968 = vld [vmem:[#allocation10 + $0x4] sm:$0xf]
        %v969 = vld [vmem:[#allocation10 + $0x8] sm:$0xf]
        %v970 = vld [vmem:[#allocation10 + $0xc] sm:$0xf]
        %v971 = vld [vmem:[#allocation10 + $0x10] sm:$0xf]
        %v972 = vld [vmem:[#allocation10 + $0x14] sm:$0xf]
        %v973 = vld [vmem:[#allocation10 + $0x18] sm:$0xf]
        %v974 = vld [vmem:[#allocation10 + $0x1c] sm:$0xf]
        %v975 = vld [vmem:[#allocation10 + $0x20] sm:$0xf]
        %v976 = vld [vmem:[#allocation10 + $0x24] sm:$0xf]
        %v977 = vld [vmem:[#allocation10 + $0x28] sm:$0xf]
        %v978 = vld [vmem:[#allocation10 + $0x2c] sm:$0xf]
        %v979 = vld [vmem:[#allocation10 + $0x30] sm:$0xf]
        %v980 = vld [vmem:[#allocation10 + $0x34] sm:$0xf]
        %v981 = vld [vmem:[#allocation10 + $0x38] sm:$0xf]
        %v982 = vld [vmem:[#allocation10 + $0x3c] sm:$0xf]
        %v999 = vunpack.c.l.b16 %v967
        %v1000 = vunpack.c.l.b16 %v968
        %v1001 = vunpack.c.l.b16 %v969
        %v1002 = vunpack.c.l.b16 %v970
        %v1003 = vunpack.c.l.b16 %v971
        %v1004 = vunpack.c.l.b16 %v972
        %v1005 = vunpack.c.l.b16 %v973
        %v1006 = vunpack.c.l.b16 %v974
        %v1007 = vunpack.c.l.b16 %v975
        %v1008 = vunpack.c.l.b16 %v976
        %v1009 = vunpack.c.l.b16 %v977
        %v1010 = vunpack.c.l.b16 %v978
        %v1011 = vunpack.c.l.b16 %v979
        %v1012 = vunpack.c.l.b16 %v980
        %v1013 = vunpack.c.l.b16 %v981
        %v1014 = vunpack.c.l.b16 %v982
        %v1015 = vpack.c.b16 %v1000, %v999
        %v1016 = vpack.c.b16 %v1002, %v1001
        %v1017 = vpack.c.b16 %v1004, %v1003
        %v1018 = vpack.c.b16 %v1006, %v1005
        %v1019 = vpack.c.b16 %v1008, %v1007
        %v1020 = vpack.c.b16 %v1010, %v1009
        %v1021 = vpack.c.b16 %v1012, %v1011
        %v1022 = vpack.c.b16 %v1014, %v1013
        %1031 = vmatprep.subr.bf16.mxu0 0
        %1032 = vmatpush1.bf16.msra.mxu0 %v1015
        %1033 = vmatprep.subr.bf16.mxu0 0
        %1034 = vmatpush1.bf16.msra.mxu0 %v1016
        %1035 = vmatprep.subr.bf16.mxu0 0
        %1036 = vmatpush1.bf16.msra.mxu0 %v1017
        %1037 = vmatprep.subr.bf16.mxu0 0
        %1038 = vmatpush1.bf16.msra.mxu0 %v1018
        %1039 = vmatprep.subr.bf16.mxu0 0
        %1040 = vmatpush1.bf16.msra.mxu0 %v1019
        %1041 = vmatprep.subr.bf16.mxu0 0
        %1042 = vmatpush1.bf16.msra.mxu0 %v1020
        %1043 = vmatprep.subr.bf16.mxu0 0
        %1044 = vmatpush1.bf16.msra.mxu0 %v1021
        %1045 = vmatprep.subr.bf16.mxu0 0
        %1046 = vmatpush1.bf16.msra.mxu0 %v1022
        %1047 = vmatprep.subr.bf16.mxu0 0
        %1048 = vmatpush1.bf16.msra.mxu0 0
        %1049 = vmatprep.subr.bf16.mxu0 0
        %1050 = vmatpush1.bf16.msra.mxu0 0
        %1051 = vmatprep.subr.bf16.mxu0 0
        %1052 = vmatpush1.bf16.msra.mxu0 0
        %1053 = vmatprep.subr.bf16.mxu0 0
        %1054 = vmatpush1.bf16.msra.mxu0 0
        %1055 = vmatprep.subr.bf16.mxu0 0
        %1056 = vmatpush1.bf16.msra.mxu0 0
        %1057 = vmatprep.subr.bf16.mxu0 0
        %1058 = vmatpush1.bf16.msra.mxu0 0
        %1059 = vmatprep.subr.bf16.mxu0 0
        %1060 = vmatpush1.bf16.msra.mxu0 0
        %1061 = vmatprep.subr.bf16.mxu0 0
        %1062 = vmatpush1.bf16.msra.mxu0 0
        %1063 = vmatprep.mubr.bf16.mxu0 0
        %1064 = vmatmul.mubr.bf16.gmra.mrb[0].mxu0 %v959
        %v1065 = vpop.f32.mrb[0].mxu0
        %v1066 = vadd.f32 0.0, %v1065
        %v1067 = vpop.f32.mrb[0].mxu0
        %v1068 = vpop.f32.mrb[0].mxu0
        %v1069 = vadd.f32 0.0, %v1068
        %v1070 = vpop.f32.mrb[0].mxu0
        %1071 = vmatprep.mubr.bf16.mxu0 0
        %1072 = vmatmul.mubr.bf16.gmra.mrb[0].mxu0 %v960
        %v1073 = vpop.f32.mrb[0].mxu0
        %v1074 = vadd.f32 0.0, %v1073
        %v1075 = vpop.f32.mrb[0].mxu0
        %v1076 = vpop.f32.mrb[0].mxu0
        %v1077 = vadd.f32 0.0, %v1076
        %v1078 = vpop.f32.mrb[0].mxu0
        %1079 = vmatprep.mubr.bf16.mxu0 0
        %1080 = vmatmul.mubr.bf16.gmra.mrb[0].mxu0 %v961
        %v1081 = vpop.f32.mrb[0].mxu0
        %v1082 = vadd.f32 0.0, %v1081
        %v1083 = vpop.f32.mrb[0].mxu0
        %v1084 = vpop.f32.mrb[0].mxu0
        %v1085 = vadd.f32 0.0, %v1084
        %v1086 = vpop.f32.mrb[0].mxu0
        %1087 = vmatprep.mubr.bf16.mxu0 0
        %1088 = vmatmul.mubr.bf16.gmra.mrb[0].mxu0 %v962
        %v1089 = vpop.f32.mrb[0].mxu0
        %v1090 = vadd.f32 0.0, %v1089
        %v1091 = vpop.f32.mrb[0].mxu0
        %v1092 = vpop.f32.mrb[0].mxu0
        %v1093 = vadd.f32 0.0, %v1092
        %v1094 = vpop.f32.mrb[0].mxu0
        %1095 = vmatprep.mubr.bf16.mxu0 0
        %1096 = vmatmul.mubr.bf16.gmra.mrb[0].mxu0 %v963
        %v1097 = vpop.f32.mrb[0].mxu0
        %v1098 = vadd.f32 0.0, %v1097
        %v1099 = vpop.f32.mrb[0].mxu0
        %v1100 = vpop.f32.mrb[0].mxu0
        %v1101 = vadd.f32 0.0, %v1100
        %v1102 = vpop.f32.mrb[0].mxu0
        %1103 = vmatprep.mubr.bf16.mxu0 0
        %1104 = vmatmul.mubr.bf16.gmra.mrb[0].mxu0 %v964
        %v1105 = vpop.f32.mrb[0].mxu0
        %v1106 = vadd.f32 0.0, %v1105
        %v1107 = vpop.f32.mrb[0].mxu0
        %v1108 = vpop.f32.mrb[0].mxu0
        %v1109 = vadd.f32 0.0, %v1108
        %v1110 = vpop.f32.mrb[0].mxu0
        %1111 = vmatprep.mubr.bf16.mxu0 0
        %1112 = vmatmul.mubr.bf16.gmra.mrb[0].mxu0 %v965
        %v1113 = vpop.f32.mrb[0].mxu0
        %v1114 = vadd.f32 0.0, %v1113
        %v1115 = vpop.f32.mrb[0].mxu0
        %v1116 = vpop.f32.mrb[0].mxu0
        %v1117 = vadd.f32 0.0, %v1116
        %v1118 = vpop.f32.mrb[0].mxu0
        %1119 = vmatprep.mubr.bf16.mxu0 0
        %1120 = vmatmul.mubr.bf16.gmra.mrb[0].mxu0 %v966
        %v1121 = vpop.f32.mrb[0].mxu0
        %v1122 = vadd.f32 0.0, %v1121
        %v1123 = vpop.f32.mrb[0].mxu0
        %v1124 = vpop.f32.mrb[0].mxu0
        %v1125 = vadd.f32 0.0, %v1124
        %v1126 = vpop.f32.mrb[0].mxu0
        %1127 = vdwg.mxu0
        %v1128 = vmul.f32 %v1066, 0.088388346
        %v1129 = vmul.f32 %v1069, 0.088388346
        %v1130 = vmul.f32 %v1074, 0.088388346
        %v1131 = vmul.f32 %v1077, 0.088388346
        %v1132 = vmul.f32 %v1082, 0.088388346
        %v1133 = vmul.f32 %v1085, 0.088388346
        %v1134 = vmul.f32 %v1090, 0.088388346
        %v1135 = vmul.f32 %v1093, 0.088388346
        %v1136 = vmul.f32 %v1098, 0.088388346
        %v1137 = vmul.f32 %v1101, 0.088388346
        %v1138 = vmul.f32 %v1106, 0.088388346
        %v1139 = vmul.f32 %v1109, 0.088388346
        %v1140 = vmul.f32 %v1114, 0.088388346
        %v1141 = vmul.f32 %v1117, 0.088388346
        %v1142 = vmul.f32 %v1122, 0.088388346
        %v1143 = vmul.f32 %v1125, 0.088388346
        %v1144 = vpack.c.bf16 %v1129, %v1128
        %v1145 = vpack.c.bf16 %v1131, %v1130
        %v1146 = vpack.c.bf16 %v1133, %v1132
        %v1147 = vpack.c.bf16 %v1135, %v1134
        %v1148 = vpack.c.bf16 %v1137, %v1136
        %v1149 = vpack.c.bf16 %v1139, %v1138
        %v1150 = vpack.c.bf16 %v1141, %v1140
        %v1151 = vpack.c.bf16 %v1143, %v1142
        %v1152 = vld [vmem:[#allocation2] sm:$0xff]
        %v1153 = vld [vmem:[#allocation2 + $0x8] sm:$0xff]
        %v1154 = vld [vmem:[#allocation2 + $0x10] sm:$0xff]
        %v1155 = vld [vmem:[#allocation2 + $0x18] sm:$0xff]
        %v1156 = vld [vmem:[#allocation2 + $0x20] sm:$0xff]
        %v1157 = vld [vmem:[#allocation2 + $0x28] sm:$0xff]
        %v1158 = vld [vmem:[#allocation2 + $0x30] sm:$0xff]
        %v1159 = vld [vmem:[#allocation2 + $0x38] sm:$0xff]
        %v1160 = vld [vmem:[#allocation2 + $0x40] sm:$0xff]
        %v1161 = vld [vmem:[#allocation2 + $0x48] sm:$0xff]
        %v1162 = vld [vmem:[#allocation2 + $0x50] sm:$0xff]
        %v1163 = vld [vmem:[#allocation2 + $0x58] sm:$0xff]
        %v1164 = vld [vmem:[#allocation2 + $0x60] sm:$0xff]
        %v1165 = vld [vmem:[#allocation2 + $0x68] sm:$0xff]
        %v1166 = vld [vmem:[#allocation2 + $0x70] sm:$0xff]
        %v1167 = vld [vmem:[#allocation2 + $0x78] sm:$0xff]
        %1168 = vmatprep.subr.bf16.mxu0 0
        %1169 = vmatpush1.bf16.xpose.msra.mxu0 %v1152
        %1170 = vmatprep.subr.bf16.mxu0 0
        %1171 = vmatpush1.bf16.xpose.msra.mxu0 %v1153
        %1172 = vmatprep.subr.bf16.mxu0 0
        %1173 = vmatpush1.bf16.xpose.msra.mxu0 %v1154
        %1174 = vmatprep.subr.bf16.mxu0 0
        %1175 = vmatpush1.bf16.xpose.msra.mxu0 %v1155
        %1176 = vmatprep.subr.bf16.mxu0 0
        %1177 = vmatpush1.bf16.xpose.msra.mxu0 %v1156
        %1178 = vmatprep.subr.bf16.mxu0 0
        %1179 = vmatpush1.bf16.xpose.msra.mxu0 %v1157
        %1180 = vmatprep.subr.bf16.mxu0 0
        %1181 = vmatpush1.bf16.xpose.msra.mxu0 %v1158
        %1182 = vmatprep.subr.bf16.mxu0 0
        %1183 = vmatpush1.bf16.xpose.msra.mxu0 %v1159
        %1184 = vmatprep.subr.bf16.mxu0 0
        %1185 = vmatpush1.bf16.xpose.msra.mxu0 %v1160
        %1186 = vmatprep.subr.bf16.mxu0 0
        %1187 = vmatpush1.bf16.xpose.msra.mxu0 %v1161
        %1188 = vmatprep.subr.bf16.mxu0 0
        %1189 = vmatpush1.bf16.xpose.msra.mxu0 %v1162
        %1190 = vmatprep.subr.bf16.mxu0 0
        %1191 = vmatpush1.bf16.xpose.msra.mxu0 %v1163
        %1192 = vmatprep.subr.bf16.mxu0 0
        %1193 = vmatpush1.bf16.xpose.msra.mxu0 %v1164
        %1194 = vmatprep.subr.bf16.mxu0 0
        %1195 = vmatpush1.bf16.xpose.msra.mxu0 %v1165
        %1196 = vmatprep.subr.bf16.mxu0 0
        %1197 = vmatpush1.bf16.xpose.msra.mxu0 %v1166
        %1198 = vmatprep.subr.bf16.mxu0 0
        %1199 = vmatpush1.bf16.xpose.msra.mxu0 %v1167
        %1200 = vmatprep.mubr.bf16.mxu0 0
        %1201 = vmatmul.mubr.bf16.gmra.mrb[0].mxu0 %v1144
        %v1202 = vpop.f32.mrb[0].mxu0
        %v1203 = vadd.f32 0.0, %v1202
        %v1204 = vpop.f32.mrb[0].mxu0
        %v1205 = vadd.f32 0.0, %v1204
        %v1206 = vpop.f32.mrb[0].mxu0
        %v1207 = vadd.f32 0.0, %v1206
        %v1208 = vpop.f32.mrb[0].mxu0
        %v1209 = vadd.f32 0.0, %v1208
        %1210 = vmatprep.mubr.bf16.mxu0 0
        %1211 = vmatmul.mubr.bf16.gmra.mrb[0].mxu0 %v1145
        %v1212 = vpop.f32.mrb[0].mxu0
        %v1213 = vadd.f32 0.0, %v1212
        %v1214 = vpop.f32.mrb[0].mxu0
        %v1215 = vadd.f32 0.0, %v1214
        %v1216 = vpop.f32.mrb[0].mxu0
        %v1217 = vadd.f32 0.0, %v1216
        %v1218 = vpop.f32.mrb[0].mxu0
        %v1219 = vadd.f32 0.0, %v1218
        %1220 = vmatprep.mubr.bf16.mxu0 0
        %1221 = vmatmul.mubr.bf16.gmra.mrb[0].mxu0 %v1146
        %v1222 = vpop.f32.mrb[0].mxu0
        %v1223 = vadd.f32 0.0, %v1222
        %v1224 = vpop.f32.mrb[0].mxu0
        %v1225 = vadd.f32 0.0, %v1224
        %v1226 = vpop.f32.mrb[0].mxu0
        %v1227 = vadd.f32 0.0, %v1226
        %v1228 = vpop.f32.mrb[0].mxu0
        %v1229 = vadd.f32 0.0, %v1228
        %1230 = vmatprep.mubr.bf16.mxu0 0
        %1231 = vmatmul.mubr.bf16.gmra.mrb[0].mxu0 %v1147
        %v1232 = vpop.f32.mrb[0].mxu0
        %v1233 = vadd.f32 0.0, %v1232
        %v1234 = vpop.f32.mrb[0].mxu0
        %v1235 = vadd.f32 0.0, %v1234
        %v1236 = vpop.f32.mrb[0].mxu0
        %v1237 = vadd.f32 0.0, %v1236
        %v1238 = vpop.f32.mrb[0].mxu0
        %v1239 = vadd.f32 0.0, %v1238
        %1240 = vmatprep.mubr.bf16.mxu0 0
        %1241 = vmatmul.mubr.bf16.gmra.mrb[0].mxu0 %v1148
        %v1242 = vpop.f32.mrb[0].mxu0
        %v1243 = vadd.f32 0.0, %v1242
        %v1244 = vpop.f32.mrb[0].mxu0
        %v1245 = vadd.f32 0.0, %v1244
        %v1246 = vpop.f32.mrb[0].mxu0
        %v1247 = vadd.f32 0.0, %v1246
        %v1248 = vpop.f32.mrb[0].mxu0
        %v1249 = vadd.f32 0.0, %v1248
        %1250 = vmatprep.mubr.bf16.mxu0 0
        %1251 = vmatmul.mubr.bf16.gmra.mrb[0].mxu0 %v1149
        %v1252 = vpop.f32.mrb[0].mxu0
        %v1253 = vadd.f32 0.0, %v1252
        %v1254 = vpop.f32.mrb[0].mxu0
        %v1255 = vadd.f32 0.0, %v1254
        %v1256 = vpop.f32.mrb[0].mxu0
        %v1257 = vadd.f32 0.0, %v1256
        %v1258 = vpop.f32.mrb[0].mxu0
        %v1259 = vadd.f32 0.0, %v1258
        %1260 = vmatprep.mubr.bf16.mxu0 0
        %1261 = vmatmul.mubr.bf16.gmra.mrb[0].mxu0 %v1150
        %v1262 = vpop.f32.mrb[0].mxu0
        %v1263 = vadd.f32 0.0, %v1262
        %v1264 = vpop.f32.mrb[0].mxu0
        %v1265 = vadd.f32 0.0, %v1264
        %v1266 = vpop.f32.mrb[0].mxu0
        %v1267 = vadd.f32 0.0, %v1266
        %v1268 = vpop.f32.mrb[0].mxu0
        %v1269 = vadd.f32 0.0, %v1268
        %1270 = vmatprep.mubr.bf16.mxu0 0
        %1271 = vmatmul.mubr.bf16.gmra.mrb[0].mxu0 %v1151
        %v1272 = vpop.f32.mrb[0].mxu0
        %v1273 = vadd.f32 0.0, %v1272
        %v1274 = vpop.f32.mrb[0].mxu0
        %v1275 = vadd.f32 0.0, %v1274
        %v1276 = vpop.f32.mrb[0].mxu0
        %v1277 = vadd.f32 0.0, %v1276
        %v1278 = vpop.f32.mrb[0].mxu0
        %v1279 = vadd.f32 0.0, %v1278
        %1280 = vdwg.mxu0
        %v1281 = vmax.f32 %v1203, %v1205
        %1282 = vmax.xlane.f32.xlu0 %v1281
        %v1283 = vpop.xlane.xlu0 %1282
        %v1284 = vmax.f32 %v1207, %v1209
        %1285 = vmax.xlane.f32.xlu0 %v1284
        %v1286 = vpop.xlane.xlu0 %1285
        %v1287 = vmax.f32 %v1213, %v1215
        %1288 = vmax.xlane.f32.xlu0 %v1287
        %v1289 = vpop.xlane.xlu0 %1288
        %v1290 = vmax.f32 %v1217, %v1219
        %1291 = vmax.xlane.f32.xlu0 %v1290
        %v1292 = vpop.xlane.xlu0 %1291
        %v1293 = vmax.f32 %v1223, %v1225
        %1294 = vmax.xlane.f32.xlu0 %v1293
        %v1295 = vpop.xlane.xlu0 %1294
        %v1296 = vmax.f32 %v1227, %v1229
        %1297 = vmax.xlane.f32.xlu0 %v1296
        %v1298 = vpop.xlane.xlu0 %1297
        %v1299 = vmax.f32 %v1233, %v1235
        %1300 = vmax.xlane.f32.xlu0 %v1299
        %v1301 = vpop.xlane.xlu0 %1300
        %v1302 = vmax.f32 %v1237, %v1239
        %1303 = vmax.xlane.f32.xlu0 %v1302
        %v1304 = vpop.xlane.xlu0 %1303
        %v1305 = vmax.f32 %v1243, %v1245
        %1306 = vmax.xlane.f32.xlu0 %v1305
        %v1307 = vpop.xlane.xlu0 %1306
        %v1308 = vmax.f32 %v1247, %v1249
        %1309 = vmax.xlane.f32.xlu0 %v1308
        %v1310 = vpop.xlane.xlu0 %1309
        %v1311 = vmax.f32 %v1253, %v1255
        %1312 = vmax.xlane.f32.xlu0 %v1311
        %v1313 = vpop.xlane.xlu0 %1312
        %v1314 = vmax.f32 %v1257, %v1259
        %1315 = vmax.xlane.f32.xlu0 %v1314
        %v1316 = vpop.xlane.xlu0 %1315
        %v1317 = vmax.f32 %v1263, %v1265
        %1318 = vmax.xlane.f32.xlu0 %v1317
        %v1319 = vpop.xlane.xlu0 %1318
        %v1320 = vmax.f32 %v1267, %v1269
        %1321 = vmax.xlane.f32.xlu0 %v1320
        %v1322 = vpop.xlane.xlu0 %1321
        %v1323 = vmax.f32 %v1273, %v1275
        %1324 = vmax.xlane.f32.xlu0 %v1323
        %v1325 = vpop.xlane.xlu0 %1324
        %v1326 = vmax.f32 %v1277, %v1279
        %1327 = vmax.xlane.f32.xlu0 %v1326
        %v1328 = vpop.xlane.xlu0 %1327
        %v1329 = vsub.f32 %v1203, %v1283
        %v1330 = vsub.f32 %v1205, %v1283
        %v1331 = vsub.f32 %v1207, %v1286
        %v1332 = vsub.f32 %v1209, %v1286
        %v1333 = vsub.f32 %v1213, %v1289
        %v1334 = vsub.f32 %v1215, %v1289
        %v1335 = vsub.f32 %v1217, %v1292
        %v1336 = vsub.f32 %v1219, %v1292
        %v1337 = vsub.f32 %v1223, %v1295
        %v1338 = vsub.f32 %v1225, %v1295
        %v1339 = vsub.f32 %v1227, %v1298
        %v1340 = vsub.f32 %v1229, %v1298
        %v1341 = vsub.f32 %v1233, %v1301
        %v1342 = vsub.f32 %v1235, %v1301
        %v1343 = vsub.f32 %v1237, %v1304
        %v1344 = vsub.f32 %v1239, %v1304
        %v1345 = vsub.f32 %v1243, %v1307
        %v1346 = vsub.f32 %v1245, %v1307
        %v1347 = vsub.f32 %v1247, %v1310
        %v1348 = vsub.f32 %v1249, %v1310
        %v1349 = vsub.f32 %v1253, %v1313
        %v1350 = vsub.f32 %v1255, %v1313
        %v1351 = vsub.f32 %v1257, %v1316
        %v1352 = vsub.f32 %v1259, %v1316
        %v1353 = vsub.f32 %v1263, %v1319
        %v1354 = vsub.f32 %v1265, %v1319
        %v1355 = vsub.f32 %v1267, %v1322
        %v1356 = vsub.f32 %v1269, %v1322
        %v1357 = vsub.f32 %v1273, %v1325
        %v1358 = vsub.f32 %v1275, %v1325
        %v1359 = vsub.f32 %v1277, %v1328
        %v1360 = vsub.f32 %v1279, %v1328
        %v1361 = vmul.f32 %v1329, 1.442695
        %v1362 = vpow.pop %v1361
        %v1363 = vmul.f32 %v1330, 1.442695
        %v1364 = vpow.pop %v1363
        %v1365 = vmul.f32 %v1331, 1.442695
        %v1366 = vpow.pop %v1365
        %v1367 = vmul.f32 %v1332, 1.442695
        %v1368 = vpow.pop %v1367
        %v1369 = vmul.f32 %v1333, 1.442695
        %v1370 = vpow.pop %v1369
        %v1371 = vmul.f32 %v1334, 1.442695
        %v1372 = vpow.pop %v1371
        %v1373 = vmul.f32 %v1335, 1.442695
        %v1374 = vpow.pop %v1373
        %v1375 = vmul.f32 %v1336, 1.442695
        %v1376 = vpow.pop %v1375
        %v1377 = vmul.f32 %v1337, 1.442695
        %v1378 = vpow.pop %v1377
        %v1379 = vmul.f32 %v1338, 1.442695
        %v1380 = vpow.pop %v1379
        %v1381 = vmul.f32 %v1339, 1.442695
        %v1382 = vpow.pop %v1381
        %v1383 = vmul.f32 %v1340, 1.442695
        %v1384 = vpow.pop %v1383
        %v1385 = vmul.f32 %v1341, 1.442695
        %v1386 = vpow.pop %v1385
        %v1387 = vmul.f32 %v1342, 1.442695
        %v1388 = vpow.pop %v1387
        %v1389 = vmul.f32 %v1343, 1.442695
        %v1390 = vpow.pop %v1389
        %v1391 = vmul.f32 %v1344, 1.442695
        %v1392 = vpow.pop %v1391
        %v1393 = vmul.f32 %v1345, 1.442695
        %v1394 = vpow.pop %v1393
        %v1395 = vmul.f32 %v1346, 1.442695
        %v1396 = vpow.pop %v1395
        %v1397 = vmul.f32 %v1347, 1.442695
        %v1398 = vpow.pop %v1397
        %v1399 = vmul.f32 %v1348, 1.442695
        %v1400 = vpow.pop %v1399
        %v1401 = vmul.f32 %v1349, 1.442695
        %v1402 = vpow.pop %v1401
        %v1403 = vmul.f32 %v1350, 1.442695
        %v1404 = vpow.pop %v1403
        %v1405 = vmul.f32 %v1351, 1.442695
        %v1406 = vpow.pop %v1405
        %v1407 = vmul.f32 %v1352, 1.442695
        %v1408 = vpow.pop %v1407
        %v1409 = vmul.f32 %v1353, 1.442695
        %v1410 = vpow.pop %v1409
        %v1411 = vmul.f32 %v1354, 1.442695
        %v1412 = vpow.pop %v1411
        %v1413 = vmul.f32 %v1355, 1.442695
        %v1414 = vpow.pop %v1413
        %v1415 = vmul.f32 %v1356, 1.442695
        %v1416 = vpow.pop %v1415
        %v1417 = vmul.f32 %v1357, 1.442695
        %v1418 = vpow.pop %v1417
        %v1419 = vmul.f32 %v1358, 1.442695
        %v1420 = vpow.pop %v1419
        %v1421 = vmul.f32 %v1359, 1.442695
        %v1422 = vpow.pop %v1421
        %v1423 = vmul.f32 %v1360, 1.442695
        %v1424 = vpow.pop %v1423
        %v1425 = vadd.f32 %v1362, %v1364
        %1426 = vadd.xlane.f32.xlu0 %v1425
        %v1427 = vpop.xlane.xlu0 %1426
        %v1428 = vadd.f32 %v1366, %v1368
        %1429 = vadd.xlane.f32.xlu0 %v1428
        %v1430 = vpop.xlane.xlu0 %1429
        %v1431 = vadd.f32 %v1370, %v1372
        %1432 = vadd.xlane.f32.xlu0 %v1431
        %v1433 = vpop.xlane.xlu0 %1432
        %v1434 = vadd.f32 %v1374, %v1376
        %1435 = vadd.xlane.f32.xlu0 %v1434
        %v1436 = vpop.xlane.xlu0 %1435
        %v1437 = vadd.f32 %v1378, %v1380
        %1438 = vadd.xlane.f32.xlu0 %v1437
        %v1439 = vpop.xlane.xlu0 %1438
        %v1440 = vadd.f32 %v1382, %v1384
        %1441 = vadd.xlane.f32.xlu0 %v1440
        %v1442 = vpop.xlane.xlu0 %1441
        %v1443 = vadd.f32 %v1386, %v1388
        %1444 = vadd.xlane.f32.xlu0 %v1443
        %v1445 = vpop.xlane.xlu0 %1444
        %v1446 = vadd.f32 %v1390, %v1392
        %1447 = vadd.xlane.f32.xlu0 %v1446
        %v1448 = vpop.xlane.xlu0 %1447
        %v1449 = vadd.f32 %v1394, %v1396
        %1450 = vadd.xlane.f32.xlu0 %v1449
        %v1451 = vpop.xlane.xlu0 %1450
        %v1452 = vadd.f32 %v1398, %v1400
        %1453 = vadd.xlane.f32.xlu0 %v1452
        %v1454 = vpop.xlane.xlu0 %1453
        %v1455 = vadd.f32 %v1402, %v1404
        %1456 = vadd.xlane.f32.xlu0 %v1455
        %v1457 = vpop.xlane.xlu0 %1456
        %v1458 = vadd.f32 %v1406, %v1408
        %1459 = vadd.xlane.f32.xlu0 %v1458
        %v1460 = vpop.xlane.xlu0 %1459
        %v1461 = vadd.f32 %v1410, %v1412
        %1462 = vadd.xlane.f32.xlu0 %v1461
        %v1463 = vpop.xlane.xlu0 %1462
        %v1464 = vadd.f32 %v1414, %v1416
        %1465 = vadd.xlane.f32.xlu0 %v1464
        %v1466 = vpop.xlane.xlu0 %1465
        %v1467 = vadd.f32 %v1418, %v1420
        %1468 = vadd.xlane.f32.xlu0 %v1467
        %v1469 = vpop.xlane.xlu0 %1468
        %v1470 = vadd.f32 %v1422, %v1424
        %1471 = vadd.xlane.f32.xlu0 %v1470
        %v1472 = vpop.xlane.xlu0 %1471
        %v1473 = vrcp.pop %v1427
        %v1474 = vrcp.pop %v1430
        %v1475 = vrcp.pop %v1433
        %v1476 = vrcp.pop %v1436
        %v1477 = vrcp.pop %v1439
        %v1478 = vrcp.pop %v1442
        %v1479 = vrcp.pop %v1445
        %v1480 = vrcp.pop %v1448
        %v1481 = vrcp.pop %v1451
        %v1482 = vrcp.pop %v1454
        %v1483 = vrcp.pop %v1457
        %v1484 = vrcp.pop %v1460
        %v1485 = vrcp.pop %v1463
        %v1486 = vrcp.pop %v1466
        %v1487 = vrcp.pop %v1469
        %v1488 = vrcp.pop %v1472
        %v1489 = vpack.c.bf16 %v1366, %v1362
        %v1490 = vpack.c.bf16 %v1368, %v1364
        %v1491 = vpack.c.bf16 %v1374, %v1370
        %v1492 = vpack.c.bf16 %v1376, %v1372
        %v1493 = vpack.c.bf16 %v1382, %v1378
        %v1494 = vpack.c.bf16 %v1384, %v1380
        %v1495 = vpack.c.bf16 %v1390, %v1386
        %v1496 = vpack.c.bf16 %v1392, %v1388
        %v1497 = vpack.c.bf16 %v1398, %v1394
        %v1498 = vpack.c.bf16 %v1400, %v1396
        %v1499 = vpack.c.bf16 %v1406, %v1402
        %v1500 = vpack.c.bf16 %v1408, %v1404
        %v1501 = vpack.c.bf16 %v1414, %v1410
        %v1502 = vpack.c.bf16 %v1416, %v1412
        %v1503 = vpack.c.bf16 %v1422, %v1418
        %v1504 = vpack.c.bf16 %v1424, %v1420
        %v1505 = vld [vmem:[#allocation3] sm:$0xff]
        %v1506 = vld [vmem:[#allocation3 + $0x8] sm:$0xff]
        %v1507 = vld [vmem:[#allocation3 + $0x10] sm:$0xff]
        %v1508 = vld [vmem:[#allocation3 + $0x18] sm:$0xff]
        %v1509 = vld [vmem:[#allocation3 + $0x20] sm:$0xff]
        %v1510 = vld [vmem:[#allocation3 + $0x28] sm:$0xff]
        %v1511 = vld [vmem:[#allocation3 + $0x30] sm:$0xff]
        %v1512 = vld [vmem:[#allocation3 + $0x38] sm:$0xff]
        %v1513 = vld [vmem:[#allocation3 + $0x40] sm:$0xff]
        %v1514 = vld [vmem:[#allocation3 + $0x48] sm:$0xff]
        %v1515 = vld [vmem:[#allocation3 + $0x50] sm:$0xff]
        %v1516 = vld [vmem:[#allocation3 + $0x58] sm:$0xff]
        %v1517 = vld [vmem:[#allocation3 + $0x60] sm:$0xff]
        %v1518 = vld [vmem:[#allocation3 + $0x68] sm:$0xff]
        %v1519 = vld [vmem:[#allocation3 + $0x70] sm:$0xff]
        %v1520 = vld [vmem:[#allocation3 + $0x78] sm:$0xff]
        %1521 = vmatprep.subr.bf16.mxu0 0
        %1522 = vmatpush1.bf16.msra.mxu0 %v1505
        %1523 = vmatprep.subr.bf16.mxu0 0
        %1524 = vmatpush1.bf16.msra.mxu0 %v1506
        %1525 = vmatprep.subr.bf16.mxu0 0
        %1526 = vmatpush1.bf16.msra.mxu0 %v1507
        %1527 = vmatprep.subr.bf16.mxu0 0
        %1528 = vmatpush1.bf16.msra.mxu0 %v1508
        %1529 = vmatprep.subr.bf16.mxu0 0
        %1530 = vmatpush1.bf16.msra.mxu0 %v1509
        %1531 = vmatprep.subr.bf16.mxu0 0
        %1532 = vmatpush1.bf16.msra.mxu0 %v1510
        %1533 = vmatprep.subr.bf16.mxu0 0
        %1534 = vmatpush1.bf16.msra.mxu0 %v1511
        %1535 = vmatprep.subr.bf16.mxu0 0
        %1536 = vmatpush1.bf16.msra.mxu0 %v1512
        %1537 = vmatprep.subr.bf16.mxu0 0
        %1538 = vmatpush1.bf16.msra.mxu0 %v1513
        %1539 = vmatprep.subr.bf16.mxu0 0
        %1540 = vmatpush1.bf16.msra.mxu0 %v1514
        %1541 = vmatprep.subr.bf16.mxu0 0
        %1542 = vmatpush1.bf16.msra.mxu0 %v1515
        %1543 = vmatprep.subr.bf16.mxu0 0
        %1544 = vmatpush1.bf16.msra.mxu0 %v1516
        %1545 = vmatprep.subr.bf16.mxu0 0
        %1546 = vmatpush1.bf16.msra.mxu0 %v1517
        %1547 = vmatprep.subr.bf16.mxu0 0
        %1548 = vmatpush1.bf16.msra.mxu0 %v1518
        %1549 = vmatprep.subr.bf16.mxu0 0
        %1550 = vmatpush1.bf16.msra.mxu0 %v1519
        %1551 = vmatprep.subr.bf16.mxu0 0
        %1552 = vmatpush1.bf16.msra.mxu0 %v1520
        %1553 = vmatprep.mubr.bf16.mxu0 %v1490
        %1554 = vmatmul.mubr.bf16.gmra.mrb[0].mxu0 %v1489
        %v1555 = vpop.f32.mrb[0].mxu0
        %v1556 = vadd.f32 0.0, %v1555
        %v1557 = vpop.f32.mrb[0].mxu0
        %v1558 = vpop.f32.mrb[0].mxu0
        %v1559 = vadd.f32 0.0, %v1558
        %v1560 = vpop.f32.mrb[0].mxu0
        %1561 = vmatprep.mubr.bf16.mxu0 %v1492
        %1562 = vmatmul.mubr.bf16.gmra.mrb[0].mxu0 %v1491
        %v1563 = vpop.f32.mrb[0].mxu0
        %v1564 = vadd.f32 0.0, %v1563
        %v1565 = vpop.f32.mrb[0].mxu0
        %v1566 = vpop.f32.mrb[0].mxu0
        %v1567 = vadd.f32 0.0, %v1566
        %v1568 = vpop.f32.mrb[0].mxu0
        %1569 = vmatprep.mubr.bf16.mxu0 %v1494
        %1570 = vmatmul.mubr.bf16.gmra.mrb[0].mxu0 %v1493
        %v1571 = vpop.f32.mrb[0].mxu0
        %v1572 = vadd.f32 0.0, %v1571
        %v1573 = vpop.f32.mrb[0].mxu0
        %v1574 = vpop.f32.mrb[0].mxu0
        %v1575 = vadd.f32 0.0, %v1574
        %v1576 = vpop.f32.mrb[0].mxu0
        %1577 = vmatprep.mubr.bf16.mxu0 %v1496
        %1578 = vmatmul.mubr.bf16.gmra.mrb[0].mxu0 %v1495
        %v1579 = vpop.f32.mrb[0].mxu0
        %v1580 = vadd.f32 0.0, %v1579
        %v1581 = vpop.f32.mrb[0].mxu0
        %v1582 = vpop.f32.mrb[0].mxu0
        %v1583 = vadd.f32 0.0, %v1582
        %v1584 = vpop.f32.mrb[0].mxu0
        %1585 = vmatprep.mubr.bf16.mxu0 %v1498
        %1586 = vmatmul.mubr.bf16.gmra.mrb[0].mxu0 %v1497
        %v1587 = vpop.f32.mrb[0].mxu0
        %v1588 = vadd.f32 0.0, %v1587
        %v1589 = vpop.f32.mrb[0].mxu0
        %v1590 = vpop.f32.mrb[0].mxu0
        %v1591 = vadd.f32 0.0, %v1590
        %v1592 = vpop.f32.mrb[0].mxu0
        %1593 = vmatprep.mubr.bf16.mxu0 %v1500
        %1594 = vmatmul.mubr.bf16.gmra.mrb[0].mxu0 %v1499
        %v1595 = vpop.f32.mrb[0].mxu0
        %v1596 = vadd.f32 0.0, %v1595
        %v1597 = vpop.f32.mrb[0].mxu0
        %v1598 = vpop.f32.mrb[0].mxu0
        %v1599 = vadd.f32 0.0, %v1598
        %v1600 = vpop.f32.mrb[0].mxu0
        %1601 = vmatprep.mubr.bf16.mxu0 %v1502
        %1602 = vmatmul.mubr.bf16.gmra.mrb[0].mxu0 %v1501
        %v1603 = vpop.f32.mrb[0].mxu0
        %v1604 = vadd.f32 0.0, %v1603
        %v1605 = vpop.f32.mrb[0].mxu0
        %v1606 = vpop.f32.mrb[0].mxu0
        %v1607 = vadd.f32 0.0, %v1606
        %v1608 = vpop.f32.mrb[0].mxu0
        %1609 = vmatprep.mubr.bf16.mxu0 %v1504
        %1610 = vmatmul.mubr.bf16.gmra.mrb[0].mxu0 %v1503
        %v1611 = vpop.f32.mrb[0].mxu0
        %v1612 = vadd.f32 0.0, %v1611
        %v1613 = vpop.f32.mrb[0].mxu0
        %v1614 = vpop.f32.mrb[0].mxu0
        %v1615 = vadd.f32 0.0, %v1614
        %v1616 = vpop.f32.mrb[0].mxu0
        %1617 = vdwg.mxu0
        %v1618 = vmul.f32 %v1556, %v1473
        %v1619 = vmul.f32 %v1559, %v1474
        %v1620 = vmul.f32 %v1564, %v1475
        %v1621 = vmul.f32 %v1567, %v1476
        %v1622 = vmul.f32 %v1572, %v1477
        %v1623 = vmul.f32 %v1575, %v1478
        %v1624 = vmul.f32 %v1580, %v1479
        %v1625 = vmul.f32 %v1583, %v1480
        %v1626 = vmul.f32 %v1588, %v1481
        %v1627 = vmul.f32 %v1591, %v1482
        %v1628 = vmul.f32 %v1596, %v1483
        %v1629 = vmul.f32 %v1599, %v1484
        %v1630 = vmul.f32 %v1604, %v1485
        %v1631 = vmul.f32 %v1607, %v1486
        %v1632 = vmul.f32 %v1612, %v1487
        %v1633 = vmul.f32 %v1615, %v1488
        %v1634 = vpack.c.bf16 %v1619, %v1618
        %v1635 = vpack.c.bf16 %v1621, %v1620
        %v1636 = vpack.c.bf16 %v1623, %v1622
        %v1637 = vpack.c.bf16 %v1625, %v1624
        %v1638 = vpack.c.bf16 %v1627, %v1626
        %v1639 = vpack.c.bf16 %v1629, %v1628
        %v1640 = vpack.c.bf16 %v1631, %v1630
        %v1641 = vpack.c.bf16 %v1633, %v1632
        %v1642 = vld [vmem:[#allocation13] sm:$0xf]
        %v1643 = vld [vmem:[#allocation13 + $0x4] sm:$0xf]
        %v1644 = vld [vmem:[#allocation13 + $0x8] sm:$0xf]
        %v1645 = vld [vmem:[#allocation13 + $0xc] sm:$0xf]
        %v1646 = vld [vmem:[#allocation13 + $0x10] sm:$0xf]
        %v1647 = vld [vmem:[#allocation13 + $0x14] sm:$0xf]
        %v1648 = vld [vmem:[#allocation13 + $0x18] sm:$0xf]
        %v1649 = vld [vmem:[#allocation13 + $0x1c] sm:$0xf]
        %v1650 = vld [vmem:[#allocation13 + $0x20] sm:$0xf]
        %v1651 = vld [vmem:[#allocation13 + $0x24] sm:$0xf]
        %v1652 = vld [vmem:[#allocation13 + $0x28] sm:$0xf]
        %v1653 = vld [vmem:[#allocation13 + $0x2c] sm:$0xf]
        %v1654 = vld [vmem:[#allocation13 + $0x30] sm:$0xf]
        %v1655 = vld [vmem:[#allocation13 + $0x34] sm:$0xf]
        %v1656 = vld [vmem:[#allocation13 + $0x38] sm:$0xf]
        %v1657 = vld [vmem:[#allocation13 + $0x3c] sm:$0xf]
        %v1674 = vunpack.c.l.b16 %v1642
        %v1675 = vunpack.c.l.b16 %v1643
        %v1676 = vunpack.c.l.b16 %v1644
        %v1677 = vunpack.c.l.b16 %v1645
        %v1678 = vunpack.c.l.b16 %v1646
        %v1679 = vunpack.c.l.b16 %v1647
        %v1680 = vunpack.c.l.b16 %v1648
        %v1681 = vunpack.c.l.b16 %v1649
        %v1682 = vunpack.c.l.b16 %v1650
        %v1683 = vunpack.c.l.b16 %v1651
        %v1684 = vunpack.c.l.b16 %v1652
        %v1685 = vunpack.c.l.b16 %v1653
        %v1686 = vunpack.c.l.b16 %v1654
        %v1687 = vunpack.c.l.b16 %v1655
        %v1688 = vunpack.c.l.b16 %v1656
        %v1689 = vunpack.c.l.b16 %v1657
        %v1690 = vpack.c.b16 %v1675, %v1674
        %v1691 = vpack.c.b16 %v1677, %v1676
        %v1692 = vpack.c.b16 %v1679, %v1678
        %v1693 = vpack.c.b16 %v1681, %v1680
        %v1694 = vpack.c.b16 %v1683, %v1682
        %v1695 = vpack.c.b16 %v1685, %v1684
        %v1696 = vpack.c.b16 %v1687, %v1686
        %v1697 = vpack.c.b16 %v1689, %v1688
        %1706 = vmatprep.subr.bf16.mxu0 0
        %1707 = vmatpush1.bf16.msra.mxu0 %v1690
        %1708 = vmatprep.subr.bf16.mxu0 0
        %1709 = vmatpush1.bf16.msra.mxu0 %v1691
        %1710 = vmatprep.subr.bf16.mxu0 0
        %1711 = vmatpush1.bf16.msra.mxu0 %v1692
        %1712 = vmatprep.subr.bf16.mxu0 0
        %1713 = vmatpush1.bf16.msra.mxu0 %v1693
        %1714 = vmatprep.subr.bf16.mxu0 0
        %1715 = vmatpush1.bf16.msra.mxu0 %v1694
        %1716 = vmatprep.subr.bf16.mxu0 0
        %1717 = vmatpush1.bf16.msra.mxu0 %v1695
        %1718 = vmatprep.subr.bf16.mxu0 0
        %1719 = vmatpush1.bf16.msra.mxu0 %v1696
        %1720 = vmatprep.subr.bf16.mxu0 0
        %1721 = vmatpush1.bf16.msra.mxu0 %v1697
        %1722 = vmatprep.subr.bf16.mxu0 0
        %1723 = vmatpush1.bf16.msra.mxu0 0
        %1724 = vmatprep.subr.bf16.mxu0 0
        %1725 = vmatpush1.bf16.msra.mxu0 0
        %1726 = vmatprep.subr.bf16.mxu0 0
        %1727 = vmatpush1.bf16.msra.mxu0 0
        %1728 = vmatprep.subr.bf16.mxu0 0
        %1729 = vmatpush1.bf16.msra.mxu0 0
        %1730 = vmatprep.subr.bf16.mxu0 0
        %1731 = vmatpush1.bf16.msra.mxu0 0
        %1732 = vmatprep.subr.bf16.mxu0 0
        %1733 = vmatpush1.bf16.msra.mxu0 0
        %1734 = vmatprep.subr.bf16.mxu0 0
        %1735 = vmatpush1.bf16.msra.mxu0 0
        %1736 = vmatprep.subr.bf16.mxu0 0
        %1737 = vmatpush1.bf16.msra.mxu0 0
        %1738 = vmatprep.mubr.bf16.mxu0 0
        %1739 = vmatmul.mubr.bf16.gmra.mrb[0].mxu0 %v1634
        %v1740 = vpop.f32.mrb[0].mxu0
        %v1741 = vadd.f32 0.0, %v1740
        %v1742 = vpop.f32.mrb[0].mxu0
        %v1743 = vpop.f32.mrb[0].mxu0
        %v1744 = vadd.f32 0.0, %v1743
        %v1745 = vpop.f32.mrb[0].mxu0
        %1746 = vmatprep.mubr.bf16.mxu0 0
        %1747 = vmatmul.mubr.bf16.gmra.mrb[0].mxu0 %v1635
        %v1748 = vpop.f32.mrb[0].mxu0
        %v1749 = vadd.f32 0.0, %v1748
        %v1750 = vpop.f32.mrb[0].mxu0
        %v1751 = vpop.f32.mrb[0].mxu0
        %v1752 = vadd.f32 0.0, %v1751
        %v1753 = vpop.f32.mrb[0].mxu0
        %1754 = vmatprep.mubr.bf16.mxu0 0
        %1755 = vmatmul.mubr.bf16.gmra.mrb[0].mxu0 %v1636
        %v1756 = vpop.f32.mrb[0].mxu0
        %v1757 = vadd.f32 0.0, %v1756
        %v1758 = vpop.f32.mrb[0].mxu0
        %v1759 = vpop.f32.mrb[0].mxu0
        %v1760 = vadd.f32 0.0, %v1759
        %v1761 = vpop.f32.mrb[0].mxu0
        %1762 = vmatprep.mubr.bf16.mxu0 0
        %1763 = vmatmul.mubr.bf16.gmra.mrb[0].mxu0 %v1637
        %v1764 = vpop.f32.mrb[0].mxu0
        %v1765 = vadd.f32 0.0, %v1764
        %v1766 = vpop.f32.mrb[0].mxu0
        %v1767 = vpop.f32.mrb[0].mxu0
        %v1768 = vadd.f32 0.0, %v1767
        %v1769 = vpop.f32.mrb[0].mxu0
        %1770 = vmatprep.mubr.bf16.mxu0 0
        %1771 = vmatmul.mubr.bf16.gmra.mrb[0].mxu0 %v1638
        %v1772 = vpop.f32.mrb[0].mxu0
        %v1773 = vadd.f32 0.0, %v1772
        %v1774 = vpop.f32.mrb[0].mxu0
        %v1775 = vpop.f32.mrb[0].mxu0
        %v1776 = vadd.f32 0.0, %v1775
        %v1777 = vpop.f32.mrb[0].mxu0
        %1778 = vmatprep.mubr.bf16.mxu0 0
        %1779 = vmatmul.mubr.bf16.gmra.mrb[0].mxu0 %v1639
        %v1780 = vpop.f32.mrb[0].mxu0
        %v1781 = vadd.f32 0.0, %v1780
        %v1782 = vpop.f32.mrb[0].mxu0
        %v1783 = vpop.f32.mrb[0].mxu0
        %v1784 = vadd.f32 0.0, %v1783
        %v1785 = vpop.f32.mrb[0].mxu0
        %1786 = vmatprep.mubr.bf16.mxu0 0
        %1787 = vmatmul.mubr.bf16.gmra.mrb[0].mxu0 %v1640
        %v1788 = vpop.f32.mrb[0].mxu0
        %v1789 = vadd.f32 0.0, %v1788
        %v1790 = vpop.f32.mrb[0].mxu0
        %v1791 = vpop.f32.mrb[0].mxu0
        %v1792 = vadd.f32 0.0, %v1791
        %v1793 = vpop.f32.mrb[0].mxu0
        %1794 = vmatprep.mubr.bf16.mxu0 0
        %1795 = vmatmul.mubr.bf16.gmra.mrb[0].mxu0 %v1641
        %v1796 = vpop.f32.mrb[0].mxu0
        %v1797 = vadd.f32 0.0, %v1796
        %v1798 = vpop.f32.mrb[0].mxu0
        %v1799 = vpop.f32.mrb[0].mxu0
        %v1800 = vadd.f32 0.0, %v1799
        %v1801 = vpop.f32.mrb[0].mxu0
        %1802 = vdwg.mxu0
        %v1803 = vadd.f32 %v1066, %v1741
        %v1804 = vadd.f32 %v1069, %v1744
        %v1805 = vadd.f32 %v1074, %v1749
        %v1806 = vadd.f32 %v1077, %v1752
        %v1807 = vadd.f32 %v1082, %v1757
        %v1808 = vadd.f32 %v1085, %v1760
        %v1809 = vadd.f32 %v1090, %v1765
        %v1810 = vadd.f32 %v1093, %v1768
        %v1811 = vadd.f32 %v1098, %v1773
        %v1812 = vadd.f32 %v1101, %v1776
        %v1813 = vadd.f32 %v1106, %v1781
        %v1814 = vadd.f32 %v1109, %v1784
        %v1815 = vadd.f32 %v1114, %v1789
        %v1816 = vadd.f32 %v1117, %v1792
        %v1817 = vadd.f32 %v1122, %v1797
        %v1818 = vadd.f32 %v1125, %v1800
        %v1819 = vpack.c.bf16 %v1804, %v1803
        %v1820 = vpack.c.bf16 %v1806, %v1805
        %v1821 = vpack.c.bf16 %v1808, %v1807
        %v1822 = vpack.c.bf16 %v1810, %v1809
        %v1823 = vpack.c.bf16 %v1812, %v1811
        %v1824 = vpack.c.bf16 %v1814, %v1813
        %v1825 = vpack.c.bf16 %v1816, %v1815
        %v1826 = vpack.c.bf16 %v1818, %v1817
        %v1827 = vld [vmem:[#allocation14] sm:$0xf]
        %v1828 = vld [vmem:[#allocation14 + $0x4] sm:$0xf]
        %v1829 = vld [vmem:[#allocation14 + $0x8] sm:$0xf]
        %v1830 = vld [vmem:[#allocation14 + $0xc] sm:$0xf]
        %v1831 = vld [vmem:[#allocation14 + $0x10] sm:$0xf]
        %v1832 = vld [vmem:[#allocation14 + $0x14] sm:$0xf]
        %v1833 = vld [vmem:[#allocation14 + $0x18] sm:$0xf]
        %v1834 = vld [vmem:[#allocation14 + $0x1c] sm:$0xf]
        %v1835 = vld [vmem:[#allocation14 + $0x20] sm:$0xf]
        %v1836 = vld [vmem:[#allocation14 + $0x24] sm:$0xf]
        %v1837 = vld [vmem:[#allocation14 + $0x28] sm:$0xf]
        %v1838 = vld [vmem:[#allocation14 + $0x2c] sm:$0xf]
        %v1839 = vld [vmem:[#allocation14 + $0x30] sm:$0xf]
        %v1840 = vld [vmem:[#allocation14 + $0x34] sm:$0xf]
        %v1841 = vld [vmem:[#allocation14 + $0x38] sm:$0xf]
        %v1842 = vld [vmem:[#allocation14 + $0x3c] sm:$0xf]
        %v1843 = vld [vmem:[%s6] sm:$0x1]
        %v1845 = vlaneseq
        %v1846 = vshrl.u32 %v1845, 7
        %v1847 = vsub.s32 0, %v1846
        %v1848 = vrot.slane %v1843, %v1847
        %v1866 = vunpack.c.l.b16 %v1827
        %v1867 = vunpack.c.l.b16 %v1828
        %v1868 = vunpack.c.l.b16 %v1829
        %v1869 = vunpack.c.l.b16 %v1830
        %v1870 = vunpack.c.l.b16 %v1831
        %v1871 = vunpack.c.l.b16 %v1832
        %v1872 = vunpack.c.l.b16 %v1833
        %v1873 = vunpack.c.l.b16 %v1834
        %v1874 = vunpack.c.l.b16 %v1835
        %v1875 = vunpack.c.l.b16 %v1836
        %v1876 = vunpack.c.l.b16 %v1837
        %v1877 = vunpack.c.l.b16 %v1838
        %v1878 = vunpack.c.l.b16 %v1839
        %v1879 = vunpack.c.l.b16 %v1840
        %v1880 = vunpack.c.l.b16 %v1841
        %v1881 = vunpack.c.l.b16 %v1842
        %v1882 = vpack.c.b16 %v1867, %v1866
        %v1883 = vpack.c.b16 %v1869, %v1868
        %v1884 = vpack.c.b16 %v1871, %v1870
        %v1885 = vpack.c.b16 %v1873, %v1872
        %v1886 = vpack.c.b16 %v1875, %v1874
        %v1887 = vpack.c.b16 %v1877, %v1876
        %v1888 = vpack.c.b16 %v1879, %v1878
        %v1889 = vpack.c.b16 %v1881, %v1880
        %1898 = vmatprep.subr.bf16.mxu0 0
        %1899 = vmatpush1.bf16.msra.mxu0 %v1882
        %1900 = vmatprep.subr.bf16.mxu0 0
        %1901 = vmatpush1.bf16.msra.mxu0 %v1883
        %1902 = vmatprep.subr.bf16.mxu0 0
        %1903 = vmatpush1.bf16.msra.mxu0 %v1884
        %1904 = vmatprep.subr.bf16.mxu0 0
        %1905 = vmatpush1.bf16.msra.mxu0 %v1885
        %1906 = vmatprep.subr.bf16.mxu0 0
        %1907 = vmatpush1.bf16.msra.mxu0 %v1886
        %1908 = vmatprep.subr.bf16.mxu0 0
        %1909 = vmatpush1.bf16.msra.mxu0 %v1887
        %1910 = vmatprep.subr.bf16.mxu0 0
        %1911 = vmatpush1.bf16.msra.mxu0 %v1888
        %1912 = vmatprep.subr.bf16.mxu0 0
        %1913 = vmatpush1.bf16.msra.mxu0 %v1889
        %1914 = vmatprep.subr.bf16.mxu0 0
        %1915 = vmatpush1.bf16.msra.mxu0 0
        %1916 = vmatprep.subr.bf16.mxu0 0
        %1917 = vmatpush1.bf16.msra.mxu0 0
        %1918 = vmatprep.subr.bf16.mxu0 0
        %1919 = vmatpush1.bf16.msra.mxu0 0
        %1920 = vmatprep.subr.bf16.mxu0 0
        %1921 = vmatpush1.bf16.msra.mxu0 0
        %1922 = vmatprep.subr.bf16.mxu0 0
        %1923 = vmatpush1.bf16.msra.mxu0 0
        %1924 = vmatprep.subr.bf16.mxu0 0
        %1925 = vmatpush1.bf16.msra.mxu0 0
        %1926 = vmatprep.subr.bf16.mxu0 0
        %1927 = vmatpush1.bf16.msra.mxu0 0
        %1928 = vmatprep.subr.bf16.mxu0 0
        %1929 = vmatpush1.bf16.msra.mxu0 0
        %1930 = vmatprep.mubr.bf16.mxu0 0
        %1931 = vmatmul.mubr.bf16.gmra.mrb[0].mxu0 %v1819
        %v1932 = vpop.f32.mrb[0].mxu0
        %v1933 = vadd.f32 %v1848, %v1932
        %v1934 = vpop.f32.mrb[0].mxu0
        %v1935 = vpop.f32.mrb[0].mxu0
        %v1936 = vadd.f32 %v1848, %v1935
        %v1937 = vpop.f32.mrb[0].mxu0
        %1938 = vmatprep.mubr.bf16.mxu0 0
        %1939 = vmatmul.mubr.bf16.gmra.mrb[0].mxu0 %v1820
        %v1940 = vpop.f32.mrb[0].mxu0
        %v1941 = vadd.f32 %v1848, %v1940
        %v1942 = vpop.f32.mrb[0].mxu0
        %v1943 = vpop.f32.mrb[0].mxu0
        %v1944 = vadd.f32 %v1848, %v1943
        %v1945 = vpop.f32.mrb[0].mxu0
        %1946 = vmatprep.mubr.bf16.mxu0 0
        %1947 = vmatmul.mubr.bf16.gmra.mrb[0].mxu0 %v1821
        %v1948 = vpop.f32.mrb[0].mxu0
        %v1949 = vadd.f32 %v1848, %v1948
        %v1950 = vpop.f32.mrb[0].mxu0
        %v1951 = vpop.f32.mrb[0].mxu0
        %v1952 = vadd.f32 %v1848, %v1951
        %v1953 = vpop.f32.mrb[0].mxu0
        %1954 = vmatprep.mubr.bf16.mxu0 0
        %1955 = vmatmul.mubr.bf16.gmra.mrb[0].mxu0 %v1822
        %v1956 = vpop.f32.mrb[0].mxu0
        %v1957 = vadd.f32 %v1848, %v1956
        %v1958 = vpop.f32.mrb[0].mxu0
        %v1959 = vpop.f32.mrb[0].mxu0
        %v1960 = vadd.f32 %v1848, %v1959
        %v1961 = vpop.f32.mrb[0].mxu0
        %1962 = vmatprep.mubr.bf16.mxu0 0
        %1963 = vmatmul.mubr.bf16.gmra.mrb[0].mxu0 %v1823
        %v1964 = vpop.f32.mrb[0].mxu0
        %v1965 = vadd.f32 %v1848, %v1964
        %v1966 = vpop.f32.mrb[0].mxu0
        %v1967 = vpop.f32.mrb[0].mxu0
        %v1968 = vadd.f32 %v1848, %v1967
        %v1969 = vpop.f32.mrb[0].mxu0
        %1970 = vmatprep.mubr.bf16.mxu0 0
        %1971 = vmatmul.mubr.bf16.gmra.mrb[0].mxu0 %v1824
        %v1972 = vpop.f32.mrb[0].mxu0
        %v1973 = vadd.f32 %v1848, %v1972
        %v1974 = vpop.f32.mrb[0].mxu0
        %v1975 = vpop.f32.mrb[0].mxu0
        %v1976 = vadd.f32 %v1848, %v1975
        %v1977 = vpop.f32.mrb[0].mxu0
        %1978 = vmatprep.mubr.bf16.mxu0 0
        %1979 = vmatmul.mubr.bf16.gmra.mrb[0].mxu0 %v1825
        %v1980 = vpop.f32.mrb[0].mxu0
        %v1981 = vadd.f32 %v1848, %v1980
        %v1982 = vpop.f32.mrb[0].mxu0
        %v1983 = vpop.f32.mrb[0].mxu0
        %v1984 = vadd.f32 %v1848, %v1983
        %v1985 = vpop.f32.mrb[0].mxu0
        %1986 = vmatprep.mubr.bf16.mxu0 0
        %1987 = vmatmul.mubr.bf16.gmra.mrb[0].mxu0 %v1826
        %v1988 = vpop.f32.mrb[0].mxu0
        %v1989 = vadd.f32 %v1848, %v1988
        %v1990 = vpop.f32.mrb[0].mxu0
        %v1991 = vpop.f32.mrb[0].mxu0
        %v1992 = vadd.f32 %v1848, %v1991
        %v1993 = vpop.f32.mrb[0].mxu0
        %1994 = vdwg.mxu0
        %v1995 = vmax.f32 %v1933, 0.0
        %v1996 = vmax.f32 %v1936, 0.0
        %v1997 = vmax.f32 %v1941, 0.0
        %v1998 = vmax.f32 %v1944, 0.0
        %v1999 = vmax.f32 %v1949, 0.0
        %v2000 = vmax.f32 %v1952, 0.0
        %v2001 = vmax.f32 %v1957, 0.0
        %v2002 = vmax.f32 %v1960, 0.0
        %v2003 = vmax.f32 %v1965, 0.0
        %v2004 = vmax.f32 %v1968, 0.0
        %v2005 = vmax.f32 %v1973, 0.0
        %v2006 = vmax.f32 %v1976, 0.0
        %v2007 = vmax.f32 %v1981, 0.0
        %v2008 = vmax.f32 %v1984, 0.0
        %v2009 = vmax.f32 %v1989, 0.0
        %v2010 = vmax.f32 %v1992, 0.0
        %v2011 = vpack.c.bf16 %v1996, %v1995
        %v2012 = vpack.c.bf16 %v1998, %v1997
        %v2013 = vpack.c.bf16 %v2000, %v1999
        %v2014 = vpack.c.bf16 %v2002, %v2001
        %v2015 = vpack.c.bf16 %v2004, %v2003
        %v2016 = vpack.c.bf16 %v2006, %v2005
        %v2017 = vpack.c.bf16 %v2008, %v2007
        %v2018 = vpack.c.bf16 %v2010, %v2009
        %v2019 = vld [vmem:[#allocation16] sm:$0xf]
        %v2020 = vld [vmem:[#allocation16 + $0x4] sm:$0xf]
        %v2021 = vld [vmem:[#allocation16 + $0x8] sm:$0xf]
        %v2022 = vld [vmem:[#allocation16 + $0xc] sm:$0xf]
        %v2023 = vld [vmem:[#allocation16 + $0x10] sm:$0xf]
        %v2024 = vld [vmem:[#allocation16 + $0x14] sm:$0xf]
        %v2025 = vld [vmem:[#allocation16 + $0x18] sm:$0xf]
        %v2026 = vld [vmem:[#allocation16 + $0x1c] sm:$0xf]
        %v2027 = vld [vmem:[#allocation16 + $0x20] sm:$0xf]
        %v2028 = vld [vmem:[#allocation16 + $0x24] sm:$0xf]
        %v2029 = vld [vmem:[#allocation16 + $0x28] sm:$0xf]
        %v2030 = vld [vmem:[#allocation16 + $0x2c] sm:$0xf]
        %v2031 = vld [vmem:[#allocation16 + $0x30] sm:$0xf]
        %v2032 = vld [vmem:[#allocation16 + $0x34] sm:$0xf]
        %v2033 = vld [vmem:[#allocation16 + $0x38] sm:$0xf]
        %v2034 = vld [vmem:[#allocation16 + $0x3c] sm:$0xf]
        %v2035 = vld [vmem:[%s8] sm:$0x1]
        %v2037 = vlaneseq
        %v2038 = vshrl.u32 %v2037, 7
        %v2039 = vsub.s32 0, %v2038
        %v2040 = vrot.slane %v2035, %v2039
        %v2058 = vunpack.c.l.b16 %v2019
        %v2059 = vunpack.c.l.b16 %v2020
        %v2060 = vunpack.c.l.b16 %v2021
        %v2061 = vunpack.c.l.b16 %v2022
        %v2062 = vunpack.c.l.b16 %v2023
        %v2063 = vunpack.c.l.b16 %v2024
        %v2064 = vunpack.c.l.b16 %v2025
        %v2065 = vunpack.c.l.b16 %v2026
        %v2066 = vunpack.c.l.b16 %v2027
        %v2067 = vunpack.c.l.b16 %v2028
        %v2068 = vunpack.c.l.b16 %v2029
        %v2069 = vunpack.c.l.b16 %v2030
        %v2070 = vunpack.c.l.b16 %v2031
        %v2071 = vunpack.c.l.b16 %v2032
        %v2072 = vunpack.c.l.b16 %v2033
        %v2073 = vunpack.c.l.b16 %v2034
        %v2074 = vpack.c.b16 %v2059, %v2058
        %v2075 = vpack.c.b16 %v2061, %v2060
        %v2076 = vpack.c.b16 %v2063, %v2062
        %v2077 = vpack.c.b16 %v2065, %v2064
        %v2078 = vpack.c.b16 %v2067, %v2066
        %v2079 = vpack.c.b16 %v2069, %v2068
        %v2080 = vpack.c.b16 %v2071, %v2070
        %v2081 = vpack.c.b16 %v2073, %v2072
        %2090 = vmatprep.subr.bf16.mxu0 0
        %2091 = vmatpush1.bf16.msra.mxu0 %v2074
        %2092 = vmatprep.subr.bf16.mxu0 0
        %2093 = vmatpush1.bf16.msra.mxu0 %v2075
        %2094 = vmatprep.subr.bf16.mxu0 0
        %2095 = vmatpush1.bf16.msra.mxu0 %v2076
        %2096 = vmatprep.subr.bf16.mxu0 0
        %2097 = vmatpush1.bf16.msra.mxu0 %v2077
        %2098 = vmatprep.subr.bf16.mxu0 0
        %2099 = vmatpush1.bf16.msra.mxu0 %v2078
        %2100 = vmatprep.subr.bf16.mxu0 0
        %2101 = vmatpush1.bf16.msra.mxu0 %v2079
        %2102 = vmatprep.subr.bf16.mxu0 0
        %2103 = vmatpush1.bf16.msra.mxu0 %v2080
        %2104 = vmatprep.subr.bf16.mxu0 0
        %2105 = vmatpush1.bf16.msra.mxu0 %v2081
        %2106 = vmatprep.subr.bf16.mxu0 0
        %2107 = vmatpush1.bf16.msra.mxu0 0
        %2108 = vmatprep.subr.bf16.mxu0 0
        %2109 = vmatpush1.bf16.msra.mxu0 0
        %2110 = vmatprep.subr.bf16.mxu0 0
        %2111 = vmatpush1.bf16.msra.mxu0 0
        %2112 = vmatprep.subr.bf16.mxu0 0
        %2113 = vmatpush1.bf16.msra.mxu0 0
        %2114 = vmatprep.subr.bf16.mxu0 0
        %2115 = vmatpush1.bf16.msra.mxu0 0
        %2116 = vmatprep.subr.bf16.mxu0 0
        %2117 = vmatpush1.bf16.msra.mxu0 0
        %2118 = vmatprep.subr.bf16.mxu0 0
        %2119 = vmatpush1.bf16.msra.mxu0 0
        %2120 = vmatprep.subr.bf16.mxu0 0
        %2121 = vmatpush1.bf16.msra.mxu0 0
        %2122 = vmatprep.mubr.bf16.mxu0 0
        %2123 = vmatmul.mubr.bf16.gmra.mrb[0].mxu0 %v2011
        %v2124 = vpop.f32.mrb[0].mxu0
        %v2125 = vadd.f32 %v2040, %v2124
        %v2126 = vpop.f32.mrb[0].mxu0
        %v2127 = vpop.f32.mrb[0].mxu0
        %v2128 = vadd.f32 %v2040, %v2127
        %v2129 = vpop.f32.mrb[0].mxu0
        %2130 = vmatprep.mubr.bf16.mxu0 0
        %2131 = vmatmul.mubr.bf16.gmra.mrb[0].mxu0 %v2012
        %v2132 = vpop.f32.mrb[0].mxu0
        %v2133 = vadd.f32 %v2040, %v2132
        %v2134 = vpop.f32.mrb[0].mxu0
        %v2135 = vpop.f32.mrb[0].mxu0
        %v2136 = vadd.f32 %v2040, %v2135
        %v2137 = vpop.f32.mrb[0].mxu0
        %2138 = vmatprep.mubr.bf16.mxu0 0
        %2139 = vmatmul.mubr.bf16.gmra.mrb[0].mxu0 %v2013
        %v2140 = vpop.f32.mrb[0].mxu0
        %v2141 = vadd.f32 %v2040, %v2140
        %v2142 = vpop.f32.mrb[0].mxu0
        %v2143 = vpop.f32.mrb[0].mxu0
        %v2144 = vadd.f32 %v2040, %v2143
        %v2145 = vpop.f32.mrb[0].mxu0
        %2146 = vmatprep.mubr.bf16.mxu0 0
        %2147 = vmatmul.mubr.bf16.gmra.mrb[0].mxu0 %v2014
        %v2148 = vpop.f32.mrb[0].mxu0
        %v2149 = vadd.f32 %v2040, %v2148
        %v2150 = vpop.f32.mrb[0].mxu0
        %v2151 = vpop.f32.mrb[0].mxu0
        %v2152 = vadd.f32 %v2040, %v2151
        %v2153 = vpop.f32.mrb[0].mxu0
        %2154 = vmatprep.mubr.bf16.mxu0 0
        %2155 = vmatmul.mubr.bf16.gmra.mrb[0].mxu0 %v2015
        %v2156 = vpop.f32.mrb[0].mxu0
        %v2157 = vadd.f32 %v2040, %v2156
        %v2158 = vpop.f32.mrb[0].mxu0
        %v2159 = vpop.f32.mrb[0].mxu0
        %v2160 = vadd.f32 %v2040, %v2159
        %v2161 = vpop.f32.mrb[0].mxu0
        %2162 = vmatprep.mubr.bf16.mxu0 0
        %2163 = vmatmul.mubr.bf16.gmra.mrb[0].mxu0 %v2016
        %v2164 = vpop.f32.mrb[0].mxu0
        %v2165 = vadd.f32 %v2040, %v2164
        %v2166 = vpop.f32.mrb[0].mxu0
        %v2167 = vpop.f32.mrb[0].mxu0
        %v2168 = vadd.f32 %v2040, %v2167
        %v2169 = vpop.f32.mrb[0].mxu0
        %2170 = vmatprep.mubr.bf16.mxu0 0
        %2171 = vmatmul.mubr.bf16.gmra.mrb[0].mxu0 %v2017
        %v2172 = vpop.f32.mrb[0].mxu0
        %v2173 = vadd.f32 %v2040, %v2172
        %v2174 = vpop.f32.mrb[0].mxu0
        %v2175 = vpop.f32.mrb[0].mxu0
        %v2176 = vadd.f32 %v2040, %v2175
        %v2177 = vpop.f32.mrb[0].mxu0
        %2178 = vmatprep.mubr.bf16.mxu0 0
        %2179 = vmatmul.mubr.bf16.gmra.mrb[0].mxu0 %v2018
        %v2180 = vpop.f32.mrb[0].mxu0
        %v2181 = vadd.f32 %v2040, %v2180
        %v2182 = vpop.f32.mrb[0].mxu0
        %v2183 = vpop.f32.mrb[0].mxu0
        %v2184 = vadd.f32 %v2040, %v2183
        %v2185 = vpop.f32.mrb[0].mxu0
        %2186 = vdwg.mxu0
        %v2187 = vadd.f32 %v2125, %v1803
        %v2188 = vadd.f32 %v2128, %v1804
        %v2189 = vadd.f32 %v2133, %v1805
        %v2190 = vadd.f32 %v2136, %v1806
        %v2191 = vadd.f32 %v2141, %v1807
        %v2192 = vadd.f32 %v2144, %v1808
        %v2193 = vadd.f32 %v2149, %v1809
        %v2194 = vadd.f32 %v2152, %v1810
        %v2195 = vadd.f32 %v2157, %v1811
        %v2196 = vadd.f32 %v2160, %v1812
        %v2197 = vadd.f32 %v2165, %v1813
        %v2198 = vadd.f32 %v2168, %v1814
        %v2199 = vadd.f32 %v2173, %v1815
        %v2200 = vadd.f32 %v2176, %v1816
        %v2201 = vadd.f32 %v2181, %v1817
        %v2202 = vadd.f32 %v2184, %v1818
        %v2203 = vld [vmem:[%s9] sm:$0x1]
        %v2204 = vpack.c.bf16 %v2188, %v2187
        %v2205 = vpack.c.bf16 %v2190, %v2189
        %v2206 = vpack.c.bf16 %v2192, %v2191
        %v2207 = vpack.c.bf16 %v2194, %v2193
        %v2208 = vpack.c.bf16 %v2196, %v2195
        %v2209 = vpack.c.bf16 %v2198, %v2197
        %v2210 = vpack.c.bf16 %v2200, %v2199
        %v2211 = vpack.c.bf16 %v2202, %v2201
        %v2212 = vld [vmem:[#allocation4] sm:$0x1]
        %2214 = vset.pattern.permute.xlu0 0
        %2215 = vperm.xlu0 %2214, %v2212
        %v2216 = vpop.permute.xlu0 %2215
        %v2218 = vlaneseq
        %v2219 = vshrl.u32 %v2218, 7
        %v2220 = vsub.s32 0, %v2219
        %v2221 = vrot.slane %v2216, %v2220
        %2222 = vmatprep.subr.bf16.mxu0 0
        %2223 = vmatpush1.bf16.xpose.msra.mxu0 %v2204
        %2224 = vmatprep.subr.bf16.mxu0 0
        %2225 = vmatpush1.bf16.xpose.msra.mxu0 %v2205
        %2226 = vmatprep.subr.bf16.mxu0 0
        %2227 = vmatpush1.bf16.xpose.msra.mxu0 %v2206
        %2228 = vmatprep.subr.bf16.mxu0 0
        %2229 = vmatpush1.bf16.xpose.msra.mxu0 %v2207
        %2230 = vmatprep.subr.bf16.mxu0 0
        %2231 = vmatpush1.bf16.xpose.msra.mxu0 %v2208
        %2232 = vmatprep.subr.bf16.mxu0 0
        %2233 = vmatpush1.bf16.xpose.msra.mxu0 %v2209
        %2234 = vmatprep.subr.bf16.mxu0 0
        %2235 = vmatpush1.bf16.xpose.msra.mxu0 %v2210
        %2236 = vmatprep.subr.bf16.mxu0 0
        %2237 = vmatpush1.bf16.xpose.msra.mxu0 %v2211
        %2238 = vmatprep.subr.bf16.mxu0 0
        %2239 = vmatpush1.bf16.xpose.msra.mxu0 0
        %2240 = vmatprep.subr.bf16.mxu0 0
        %2241 = vmatpush1.bf16.xpose.msra.mxu0 0
        %2242 = vmatprep.subr.bf16.mxu0 0
        %2243 = vmatpush1.bf16.xpose.msra.mxu0 0
        %2244 = vmatprep.subr.bf16.mxu0 0
        %2245 = vmatpush1.bf16.xpose.msra.mxu0 0
        %2246 = vmatprep.subr.bf16.mxu0 0
        %2247 = vmatpush1.bf16.xpose.msra.mxu0 0
        %2248 = vmatprep.subr.bf16.mxu0 0
        %2249 = vmatpush1.bf16.xpose.msra.mxu0 0
        %2250 = vmatprep.subr.bf16.mxu0 0
        %2251 = vmatpush1.bf16.xpose.msra.mxu0 0
        %2252 = vmatprep.subr.bf16.mxu0 0
        %2253 = vmatpush1.bf16.xpose.msra.mxu0 0
        %2254 = vmatprep.mubr.bf16.mxu0 0
        %2255 = vmatmul.mubr.bf16.gmra.mrb[0].mxu0 %v2203
        %v2256 = vpop.f32.mrb[0].mxu0
        %v2257 = vadd.f32 %v2221, %v2256
        %v2258 = vpop.f32.mrb[0].mxu0
        %v2259 = vpop.f32.mrb[0].mxu0
        %v2260 = vpop.f32.mrb[0].mxu0
        %2261 = vdwg.mxu0
        %v2262 = vxor.u32 %v2257, 2147483648
        %v2263 = vmul.f32 %v2262, 1.442695
        %v2264 = vpow.pop %v2263
        %v2265 = vadd.f32 %v2264, 1.0
        %v2266 = vrcp.pop %v2265
        %v2267 = vmul.f32 1.0, %v2266
        %2268 = vst [vmem:[%s535] sm:$0x1] %v2267
        %s2269 = sand.u32 %s300, 1
        %s2270 = scalar_lea.sflag [#allocation7], %s2269
        %s2271 = sand.u32 %s300, 1
        %s2272 = scalar_lea.vmem [#allocation17], %s2271
        // Predicated region
        $region97: #{tpu_custom_call.1} parent=63 // pred_check
          %p2273 = pneg %p310
        $region98: #{tpu_custom_call.1} parent=63 // pred_check_branch
          %2275 = sbr.rel (%p2273) target = $region100
        $region99: #{tpu_custom_call.1} parent=63 // pred_region
          %s2277 = ssub.s32 16, 16
          %2278 = vsyncadd %s2270, %s2277
          %s2279 = smul.addr %s39, 2
          %s2280 = sadd.s32 %s40, %s2279
          %s2281 = smul.addr %s2280, 16
          %s2282 = scalar_lea.hbm %s11, %s2281
          %s2284 = sshll.u32 %s2272, 4
          %s2285 = int_to_ptr.vmem [resolvable:$true] %s2284
          %2287 = dma.vmem_to_hbm [thread:$0]  %s2285, 16, %s2282, %s2270
        $region100: #{tpu_custom_call.1} parent=63 // pred_fallthru
          _
      $region64: #{tpu_custom_call.1} parent=5 // pred_fallthru
        _
      %p2288 = scmp.le.s32.totalorder 2, %s30
      // Predicated region
      $region101: #{tpu_custom_call.1} parent=5 // pred_check
        %p2289 = pneg %p2288
      $region102: #{tpu_custom_call.1} parent=5 // pred_check_branch
        %2291 = sbr.rel (%p2289) target = $region104
      $region103: #{tpu_custom_call.1} parent=5 // pred_region
        %s2292 = ssub.s32 %s30, 2
        // Predicated region
        $region105: #{tpu_custom_call.1} parent=103 // pred_check
          %p2293 = pneg %p316
        $region106: #{tpu_custom_call.1} parent=103 // pred_check_branch
          %2295 = sbr.rel (%p2293) target = $region108
        $region107: #{tpu_custom_call.1} parent=103 // pred_region
          %s2296 = sand.u32 %s301, 1
          %s2297 = scalar_lea.sflag [#allocation7], %s2296
          %s2298 = sand.u32 %s301, 1
          %s2299 = scalar_lea.vmem [#allocation17], %s2298
          %2300 = dma.done %s2297, 16
        $region108: #{tpu_custom_call.1} parent=103 // pred_fallthru
          _
      $region104: #{tpu_custom_call.1} parent=5 // pred_fallthru
        _
    $region6: #{tpu_custom_call.1} parent=1 // loop_footer
      %s34 = sadd.s32 1, %s30
    $region7: #{tpu_custom_call.1} parent=1 // loop_footer_branch
      %29 = sbr.rel target = $region3
    $region8: #{tpu_custom_call.1} parent=1 // loop_exit
      _
    %2301 = vsyncpa [#allocation6], 1
    %s2302 = scalar_lea.sflag [#allocation6], 1
    %2303 = vsyncpa %s2302, 1
    %2304 = vsyncpa [#allocation9], 1
    %s2305 = scalar_lea.sflag [#allocation9], 1
    %2306 = vsyncpa %s2305, 1
    %2307 = vsyncpa [#allocation12], 1
    %2308 = vsyncpa [#allocation15], 1
    %2309 = vsyncpa [#allocation7], 1
    %s2310 = scalar_lea.sflag [#allocation7], 1
    %2311 = vsyncpa %s2310, 1

</llo_original>
